<compile_context>
chip_gen: v7x
topology: tpu7x:2x2x1
jax: 0.10.0
libtpu: 0.0.40
codegen_flags: <defaults>
</compile_context>

<pallas_src>
import math

import numpy as np
import jax
import jax.numpy as jnp
from jax.experimental import pallas as pl
from jax.experimental.pallas import tpu as pltpu

# ----- model config (mirrors `args` of the PyTorch module) -------------------
TENSOR_SIZE = (4, 4, 4)        # args.tensor_size (uniform so modes stack)
INPUT_SHAPE = (4, 4, 4)        # args.input_shape
IN_RANK = 2                    # args.in_rank   -> encoder output dim = 4
OUT_RANK = 2                   # args.out_rank  -> decoder output dim = 4
H_DIM = (32,)                  # args.h_dim
INPUT_TYPE = "continuous"      # -> squared-error NLL branch of forward()
BATCH = 2

D = len(TENSOR_SIZE)                               # tensor_dim = 3
N = TENSOR_SIZE[0]                                 # mode size = 4
M = math.prod(TENSOR_SIZE) // N                    # unfolding width = 16
H = H_DIM[0]
R_IN2 = IN_RANK * IN_RANK
R_OUT2 = OUT_RANK * OUT_RANK


def _elu(x):
    # torch.nn.ELU(alpha=1.0); exp() is taken on min(x, 0) so the unselected
    # branch never overflows (also keeps gradients NaN-free if differentiated).
    return jnp.where(x > 0, x, jnp.exp(jnp.minimum(x, 0.0)) - 1.0)


# -----------------------------------------------------------------------------
# Constant 0/1 matrices that turn the TR contraction
#   X[b,i,j,k] = trace(G1[b,i] @ G2[b,j] @ G3[b,k])
# into plain matmuls + elementwise masks (no in-kernel relayouts).
# -----------------------------------------------------------------------------
def _tr_constants(batch, n, r):
    rr, rrr, nn = r * r, r * r * r, n * n
    p1 = np.zeros((rr, rr), np.float32)       # c1 cols (p,q)  -> (q,p)
    e2 = np.zeros((rr, rrr), np.float32)      # c2 cols (q,s)  -> (q,s,p) (all p)
    e3 = np.zeros((rr, rrr), np.float32)      # c3 cols (s,p)  -> (q,s,p) (all q)
    s_sum = np.zeros((rrr, rr), np.float32)   # sum over s: (q,s,p) -> (q,p)
    for q in range(r):
        for p in range(r):
            p1[p * r + q, q * r + p] = 1.0
            for s in range(r):
                col = q * r * r + s * r + p
                e2[q * r + s, col] = 1.0
                e3[s * r + p, col] = 1.0
                s_sum[col, q * r + p] = 1.0
    rep = np.zeros((batch * nn, batch * n), np.float32)    # rows (b,j,k) <- (b,j)
    til = np.zeros((batch * nn, batch * n), np.float32)    # rows (b,j,k) <- (b,k)
    cmprs = np.zeros((batch * nn, nn), np.float32)         # (b,j,k) -> (j,k)
    for b in range(batch):
        for j in range(n):
            for k in range(n):
                row = b * nn + j * n + k
                rep[row, b * n + j] = 1.0
                til[row, b * n + k] = 1.0
                cmprs[row, j * n + k] = 1.0
    mask_bb = np.zeros((batch * n, batch * nn), np.float32)  # delta_{b,b'}
    for b in range(batch):
        mask_bb[b * n:(b + 1) * n, b * nn:(b + 1) * nn] = 1.0
    return tuple(jnp.asarray(a)
                 for a in (p1, e2, e3, s_sum, rep, til, mask_bb, cmprs))


# -----------------------------------------------------------------------------
# Single fused kernel: per-mode encoder MLP (ELU, ELU) -> per-mode decoder MLP
# (ELU, linear) -> tensor-ring contraction -> sigmoid -> squared-error NLL.
# Everything lives in VMEM; no grid.
# -----------------------------------------------------------------------------
def tr_fused_kernel(xu_ref, xc_ref,
                    ew1, eb1, ew2, eb2, dw1, db1, dw2, db2,
                    p1, e2, e3, s_sum, rep, til, mask_bb, cmprs,
                    xhat_ref, nll_ref):
    f32 = jnp.float32
    xu = xu_ref[...]                                                  # (D, B*N, M)

    # --- encoder + decoder MLPs, batched over the D modes (one MXU pass/layer)
    h = _elu(jnp.einsum('dbm,dmh->dbh', xu, ew1[...],
                        preferred_element_type=f32) + eb1[...])       # (D,B*N,H)
    z = _elu(jnp.einsum('dbh,dhk->dbk', h, ew2[...],
                        preferred_element_type=f32) + eb2[...])       # (D,B*N,r_in^2)
    g = _elu(jnp.einsum('dbk,dkh->dbh', z, dw1[...],
                        preferred_element_type=f32) + db1[...])       # (D,B*N,H)
    c = jnp.einsum('dbh,dhk->dbk', g, dw2[...],
                   preferred_element_type=f32) + db2[...]             # (D,B*N,r^2)

    c1, c2, c3 = c[0], c[1], c[2]                                     # (B*N, r^2)

    # --- tensor-ring contraction (all layout moves are constant-matrix matmuls)
    c1p = jnp.dot(c1, p1[...], preferred_element_type=f32)            # (B*N,(q,p)) = G1[b,i,p,q]
    c2b = jnp.dot(rep[...],
                  jnp.dot(c2, e2[...], preferred_element_type=f32),
                  preferred_element_type=f32)                         # (B*N*N,(q,s,p)) = G2[b,j,q,s]
    c3b = jnp.dot(til[...],
                  jnp.dot(c3, e3[...], preferred_element_type=f32),
                  preferred_element_type=f32)                         # (B*N*N,(q,s,p)) = G3[b,k,s,p]
    w = jnp.dot(c2b * c3b, s_sum[...],
                preferred_element_type=f32)                           # (B*N*N,(q,p)) = sum_s G2*G3
    xbig = jnp.einsum('im,sm->is', c1p, w,
                      preferred_element_type=f32)                     # (B*N, B*N*N)
    logits = jnp.dot(xbig * mask_bb[...], cmprs[...],
                     preferred_element_type=f32)                      # (B*N, N*N)

    # sigmoid on the EUP: exp + approximate reciprocal (frees VALU slots)
    x_hat = pl.reciprocal(1.0 + jnp.exp(-logits), approx=True)
    xhat_ref[...] = x_hat

    # forward(): nll = ((x_hat - x) ** 2).sum() / x_hat.shape[0]
    batch = xc_ref.shape[0] // N
    diff = x_hat - xc_ref[...]
    nll_ref[...] = jnp.full((1, 1), jnp.sum(diff * diff) / batch, dtype=f32)


def _fused_call(x_unf, x_cmp, params, consts):
    bn = x_unf.shape[1]
    n_in = 2 + len(params) + len(consts)
    vmem = lambda: pl.BlockSpec(memory_space=pltpu.MemorySpace.VMEM)
    return pl.pallas_call(
        tr_fused_kernel,
        out_shape=(jax.ShapeDtypeStruct((bn, N * N), jnp.float32),
                   jax.ShapeDtypeStruct((1, 1), jnp.float32)),
        in_specs=[vmem() for _ in range(n_in)],
        out_specs=(vmem(), vmem()),
    )(x_unf, x_cmp, *params, *consts)


# -----------------------------------------------------------------------------
# Forward (encode -> decode -> NLL), matching TR.forward semantics.
# -----------------------------------------------------------------------------
def tr_forward(x, params):
    b = x.shape[0]
    xt = x.reshape((b,) + TENSOR_SIZE)                     # tensorize

    # mode-d unfoldings of the input (pure input plumbing; everything after
    # this point runs inside the single fused Pallas kernel).
    unfs = []
    for d in range(D):
        perm = (0, d + 1) + tuple(a + 1 for a in range(D) if a != d)
        unfs.append(jnp.transpose(xt, perm).reshape(b * TENSOR_SIZE[d], M))
    x_unf = jnp.stack(unfs, axis=0)                        # (D, B*N, M)
    x_cmp = xt.reshape(b * N, N * N)                       # rows (b,i1), cols (i2,i3)

    consts = _tr_constants(b, N, OUT_RANK)
    xhat_flat, nll = _fused_call(x_unf, x_cmp, params, consts)
    x_hat = xhat_flat.reshape((b,) + INPUT_SHAPE)
    # PyTorch stores nll in self.loss['NELBO'] and returns x_hat; return both.
    return x_hat, nll[0, 0]


# -----------------------------------------------------------------------------
# Deterministic synthetic parameters (shapes implied by __init__).
# -----------------------------------------------------------------------------
def init_params(key):
    # per mode d (stacked along leading D axis):
    #   encoder: Linear(M->H), ELU, Linear(H->IN_RANK^2), ELU
    #   decoder: Linear(IN_RANK^2->H), ELU, Linear(H->OUT_RANK^2)
    shapes = [
        (D, M, H), (D, 1, H),          # ew1, eb1
        (D, H, R_IN2), (D, 1, R_IN2),  # ew2, eb2
        (D, R_IN2, H), (D, 1, H),      # dw1, db1
        (D, H, R_OUT2), (D, 1, R_OUT2) # dw2, db2
    ]
    keys = jax.random.split(key, len(shapes))
    params = []
    for k, s in zip(keys, shapes):
        fan_in = s[1] if s[1] > 1 else 1
        scale = 1.0 / math.sqrt(fan_in)
        params.append(scale * jax.random.normal(k, s, dtype=jnp.float32))
    return params


if __name__ == "__main__":
    key = jax.random.PRNGKey(0)
    pkey, xkey = jax.random.split(key)
    params = init_params(pkey)
    x = jax.random.uniform(xkey, (BATCH,) + INPUT_SHAPE, dtype=jnp.float32)

    x_hat, nll = jax.jit(tr_forward)(x, params)
    jax.block_until_ready((x_hat, nll))

    assert x_hat.shape == (BATCH,) + INPUT_SHAPE
    assert x_hat.dtype == jnp.float32
    assert bool(jnp.all(jnp.isfinite(x_hat))) and bool(jnp.isfinite(nll))
    print("KERNEL_OK")
</pallas_src>

<mosaic_0001>
module attributes {stable_mosaic.version = 11 : i64} {
  func.func @tr_fused_kernel(%arg0: memref<3x8x16xf32, #tpu.memory_space<vmem>>, %arg1: memref<8x16xf32, #tpu.memory_space<vmem>>, %arg2: memref<3x16x32xf32, #tpu.memory_space<vmem>>, %arg3: memref<3x1x32xf32, #tpu.memory_space<vmem>>, %arg4: memref<3x32x4xf32, #tpu.memory_space<vmem>>, %arg5: memref<3x1x4xf32, #tpu.memory_space<vmem>>, %arg6: memref<3x4x32xf32, #tpu.memory_space<vmem>>, %arg7: memref<3x1x32xf32, #tpu.memory_space<vmem>>, %arg8: memref<3x32x4xf32, #tpu.memory_space<vmem>>, %arg9: memref<3x1x4xf32, #tpu.memory_space<vmem>>, %arg10: memref<4x4xf32, #tpu.memory_space<vmem>>, %arg11: memref<4x8xf32, #tpu.memory_space<vmem>>, %arg12: memref<4x8xf32, #tpu.memory_space<vmem>>, %arg13: memref<8x4xf32, #tpu.memory_space<vmem>>, %arg14: memref<32x8xf32, #tpu.memory_space<vmem>>, %arg15: memref<32x8xf32, #tpu.memory_space<vmem>>, %arg16: memref<8x32xf32, #tpu.memory_space<vmem>>, %arg17: memref<32x16xf32, #tpu.memory_space<vmem>>, %arg18: memref<8x16xf32, #tpu.memory_space<vmem>>, %arg19: memref<1x1xf32, #tpu.memory_space<vmem>>) attributes {dimension_semantics = [], scalar_prefetch = 0 : i64, scratch_operands = 0 : i64, tpu.core_type = #tpu.core_type<tc>} {
    %c0 = arith.constant 0 : index
    %c0_0 = arith.constant 0 : index
    %c0_1 = arith.constant 0 : index
    %0 = vector.load %arg0[%c0, %c0_0, %c0_1] : memref<3x8x16xf32, #tpu.memory_space<vmem>>, vector<3x8x16xf32>
    %c0_2 = arith.constant 0 : index
    %c0_3 = arith.constant 0 : index
    %c0_4 = arith.constant 0 : index
    %1 = vector.load %arg2[%c0_2, %c0_3, %c0_4] : memref<3x16x32xf32, #tpu.memory_space<vmem>>, vector<3x16x32xf32>
    "tpu.trace_start"() <{level = 10 : i32, message = "dbm,dmh->dbh"}> : () -> ()
    %cst = arith.constant dense<0.000000e+00> : vector<3x8x32xf32>
    %2 = tpu.matmul %0, %1, %cst {dimension_numbers = #tpu.dot_dimension_numbers<[2], [1], [1], [2], [0, 0, 0, 1, 1, 2], [0], [0]>} : vector<3x8x16xf32>, vector<3x16x32xf32>, vector<3x8x32xf32> -> vector<3x8x32xf32>
    "tpu.trace_stop"() : () -> ()
    %c0_5 = arith.constant 0 : index
    %c0_6 = arith.constant 0 : index
    %c0_7 = arith.constant 0 : index
    %3 = vector.load %arg3[%c0_5, %c0_6, %c0_7] : memref<3x1x32xf32, #tpu.memory_space<vmem>>, vector<3x1x32xf32>
    %4 = vector.broadcast %3 : vector<3x1x32xf32> to vector<3x8x32xf32>
    %5 = arith.addf %2, %4 : vector<3x8x32xf32>
    %cst_8 = arith.constant 0.000000e+00 : f32
    %6 = vector.broadcast %cst_8 : f32 to vector<3x8x32xf32>
    %7 = arith.cmpf ogt, %5, %6 : vector<3x8x32xf32>
    %cst_9 = arith.constant 0.000000e+00 : f32
    %8 = vector.broadcast %cst_9 : f32 to vector<3x8x32xf32>
    %9 = arith.minimumf %5, %8 : vector<3x8x32xf32>
    %10 = math.exp %9 : vector<3x8x32xf32>
    %cst_10 = arith.constant 1.000000e+00 : f32
    %11 = vector.broadcast %cst_10 : f32 to vector<3x8x32xf32>
    %12 = arith.subf %10, %11 : vector<3x8x32xf32>
    %13 = arith.select %7, %5, %12 : vector<3x8x32xi1>, vector<3x8x32xf32>
    %c0_11 = arith.constant 0 : index
    %c0_12 = arith.constant 0 : index
    %c0_13 = arith.constant 0 : index
    %14 = vector.load %arg4[%c0_11, %c0_12, %c0_13] : memref<3x32x4xf32, #tpu.memory_space<vmem>>, vector<3x32x4xf32>
    "tpu.trace_start"() <{level = 10 : i32, message = "dbh,dhk->dbk"}> : () -> ()
    %cst_14 = arith.constant dense<0.000000e+00> : vector<3x8x4xf32>
    %15 = tpu.matmul %13, %14, %cst_14 {dimension_numbers = #tpu.dot_dimension_numbers<[2], [1], [1], [2], [0, 0, 0, 1, 1, 2], [0], [0]>} : vector<3x8x32xf32>, vector<3x32x4xf32>, vector<3x8x4xf32> -> vector<3x8x4xf32>
    "tpu.trace_stop"() : () -> ()
    %c0_15 = arith.constant 0 : index
    %c0_16 = arith.constant 0 : index
    %c0_17 = arith.constant 0 : index
    %16 = vector.load %arg5[%c0_15, %c0_16, %c0_17] : memref<3x1x4xf32, #tpu.memory_space<vmem>>, vector<3x1x4xf32>
    %17 = vector.broadcast %16 : vector<3x1x4xf32> to vector<3x8x4xf32>
    %18 = arith.addf %15, %17 : vector<3x8x4xf32>
    %cst_18 = arith.constant 0.000000e+00 : f32
    %19 = vector.broadcast %cst_18 : f32 to vector<3x8x4xf32>
    %20 = arith.cmpf ogt, %18, %19 : vector<3x8x4xf32>
    %cst_19 = arith.constant 0.000000e+00 : f32
    %21 = vector.broadcast %cst_19 : f32 to vector<3x8x4xf32>
    %22 = arith.minimumf %18, %21 : vector<3x8x4xf32>
    %23 = math.exp %22 : vector<3x8x4xf32>
    %cst_20 = arith.constant 1.000000e+00 : f32
    %24 = vector.broadcast %cst_20 : f32 to vector<3x8x4xf32>
    %25 = arith.subf %23, %24 : vector<3x8x4xf32>
    %26 = arith.select %20, %18, %25 : vector<3x8x4xi1>, vector<3x8x4xf32>
    %c0_21 = arith.constant 0 : index
    %c0_22 = arith.constant 0 : index
    %c0_23 = arith.constant 0 : index
    %27 = vector.load %arg6[%c0_21, %c0_22, %c0_23] : memref<3x4x32xf32, #tpu.memory_space<vmem>>, vector<3x4x32xf32>
    "tpu.trace_start"() <{level = 10 : i32, message = "dbk,dkh->dbh"}> : () -> ()
    %cst_24 = arith.constant dense<0.000000e+00> : vector<3x8x32xf32>
    %28 = tpu.matmul %26, %27, %cst_24 {dimension_numbers = #tpu.dot_dimension_numbers<[2], [1], [1], [2], [0, 0, 0, 1, 1, 2], [0], [0]>} : vector<3x8x4xf32>, vector<3x4x32xf32>, vector<3x8x32xf32> -> vector<3x8x32xf32>
    "tpu.trace_stop"() : () -> ()
    %c0_25 = arith.constant 0 : index
    %c0_26 = arith.constant 0 : index
    %c0_27 = arith.constant 0 : index
    %29 = vector.load %arg7[%c0_25, %c0_26, %c0_27] : memref<3x1x32xf32, #tpu.memory_space<vmem>>, vector<3x1x32xf32>
    %30 = vector.broadcast %29 : vector<3x1x32xf32> to vector<3x8x32xf32>
    %31 = arith.addf %28, %30 : vector<3x8x32xf32>
    %cst_28 = arith.constant 0.000000e+00 : f32
    %32 = vector.broadcast %cst_28 : f32 to vector<3x8x32xf32>
    %33 = arith.cmpf ogt, %31, %32 : vector<3x8x32xf32>
    %cst_29 = arith.constant 0.000000e+00 : f32
    %34 = vector.broadcast %cst_29 : f32 to vector<3x8x32xf32>
    %35 = arith.minimumf %31, %34 : vector<3x8x32xf32>
    %36 = math.exp %35 : vector<3x8x32xf32>
    %cst_30 = arith.constant 1.000000e+00 : f32
    %37 = vector.broadcast %cst_30 : f32 to vector<3x8x32xf32>
    %38 = arith.subf %36, %37 : vector<3x8x32xf32>
    %39 = arith.select %33, %31, %38 : vector<3x8x32xi1>, vector<3x8x32xf32>
    %c0_31 = arith.constant 0 : index
    %c0_32 = arith.constant 0 : index
    %c0_33 = arith.constant 0 : index
    %40 = vector.load %arg8[%c0_31, %c0_32, %c0_33] : memref<3x32x4xf32, #tpu.memory_space<vmem>>, vector<3x32x4xf32>
    "tpu.trace_start"() <{level = 10 : i32, message = "dbh,dhk->dbk"}> : () -> ()
    %cst_34 = arith.constant dense<0.000000e+00> : vector<3x8x4xf32>
    %41 = tpu.matmul %39, %40, %cst_34 {dimension_numbers = #tpu.dot_dimension_numbers<[2], [1], [1], [2], [0, 0, 0, 1, 1, 2], [0], [0]>} : vector<3x8x32xf32>, vector<3x32x4xf32>, vector<3x8x4xf32> -> vector<3x8x4xf32>
    "tpu.trace_stop"() : () -> ()
    %c0_35 = arith.constant 0 : index
    %c0_36 = arith.constant 0 : index
    %c0_37 = arith.constant 0 : index
    %42 = vector.load %arg9[%c0_35, %c0_36, %c0_37] : memref<3x1x4xf32, #tpu.memory_space<vmem>>, vector<3x1x4xf32>
    %43 = vector.broadcast %42 : vector<3x1x4xf32> to vector<3x8x4xf32>
    %44 = arith.addf %41, %43 : vector<3x8x4xf32>
    %45 = vector.extract_strided_slice %44 {offsets = [0, 0, 0], sizes = [1, 8, 4], strides = [1, 1, 1]} : vector<3x8x4xf32> to vector<1x8x4xf32>
    %46 = vector.shape_cast %45 : vector<1x8x4xf32> to vector<8x4xf32>
    %47 = vector.extract_strided_slice %44 {offsets = [1, 0, 0], sizes = [1, 8, 4], strides = [1, 1, 1]} : vector<3x8x4xf32> to vector<1x8x4xf32>
    %48 = vector.shape_cast %47 : vector<1x8x4xf32> to vector<8x4xf32>
    %49 = vector.extract_strided_slice %44 {offsets = [2, 0, 0], sizes = [1, 8, 4], strides = [1, 1, 1]} : vector<3x8x4xf32> to vector<1x8x4xf32>
    %50 = vector.shape_cast %49 : vector<1x8x4xf32> to vector<8x4xf32>
    %c0_38 = arith.constant 0 : index
    %c0_39 = arith.constant 0 : index
    %51 = vector.load %arg10[%c0_38, %c0_39] : memref<4x4xf32, #tpu.memory_space<vmem>>, vector<4x4xf32>
    %cst_40 = arith.constant dense<0.000000e+00> : vector<8x4xf32>
    %52 = tpu.matmul %46, %51, %cst_40 {dimension_numbers = #tpu.dot_dimension_numbers<[1], [0], [0], [1], [0, 0, 1, 1], [], []>} : vector<8x4xf32>, vector<4x4xf32>, vector<8x4xf32> -> vector<8x4xf32>
    %c0_41 = arith.constant 0 : index
    %c0_42 = arith.constant 0 : index
    %53 = vector.load %arg14[%c0_41, %c0_42] : memref<32x8xf32, #tpu.memory_space<vmem>>, vector<32x8xf32>
    %c0_43 = arith.constant 0 : index
    %c0_44 = arith.constant 0 : index
    %54 = vector.load %arg11[%c0_43, %c0_44] : memref<4x8xf32, #tpu.memory_space<vmem>>, vector<4x8xf32>
    %cst_45 = arith.constant dense<0.000000e+00> : vector<8x8xf32>
    %55 = tpu.matmul %48, %54, %cst_45 {dimension_numbers = #tpu.dot_dimension_numbers<[1], [0], [0], [1], [0, 0, 1, 1], [], []>} : vector<8x4xf32>, vector<4x8xf32>, vector<8x8xf32> -> vector<8x8xf32>
    %cst_46 = arith.constant dense<0.000000e+00> : vector<32x8xf32>
    %56 = tpu.matmul %53, %55, %cst_46 {dimension_numbers = #tpu.dot_dimension_numbers<[1], [0], [0], [1], [0, 0, 1, 1], [], []>} : vector<32x8xf32>, vector<8x8xf32>, vector<32x8xf32> -> vector<32x8xf32>
    %c0_47 = arith.constant 0 : index
    %c0_48 = arith.constant 0 : index
    %57 = vector.load %arg15[%c0_47, %c0_48] : memref<32x8xf32, #tpu.memory_space<vmem>>, vector<32x8xf32>
    %c0_49 = arith.constant 0 : index
    %c0_50 = arith.constant 0 : index
    %58 = vector.load %arg12[%c0_49, %c0_50] : memref<4x8xf32, #tpu.memory_space<vmem>>, vector<4x8xf32>
    %cst_51 = arith.constant dense<0.000000e+00> : vector<8x8xf32>
    %59 = tpu.matmul %50, %58, %cst_51 {dimension_numbers = #tpu.dot_dimension_numbers<[1], [0], [0], [1], [0, 0, 1, 1], [], []>} : vector<8x4xf32>, vector<4x8xf32>, vector<8x8xf32> -> vector<8x8xf32>
    %cst_52 = arith.constant dense<0.000000e+00> : vector<32x8xf32>
    %60 = tpu.matmul %57, %59, %cst_52 {dimension_numbers = #tpu.dot_dimension_numbers<[1], [0], [0], [1], [0, 0, 1, 1], [], []>} : vector<32x8xf32>, vector<8x8xf32>, vector<32x8xf32> -> vector<32x8xf32>
    %61 = arith.mulf %56, %60 : vector<32x8xf32>
    %c0_53 = arith.constant 0 : index
    %c0_54 = arith.constant 0 : index
    %62 = vector.load %arg13[%c0_53, %c0_54] : memref<8x4xf32, #tpu.memory_space<vmem>>, vector<8x4xf32>
    %cst_55 = arith.constant dense<0.000000e+00> : vector<32x4xf32>
    %63 = tpu.matmul %61, %62, %cst_55 {dimension_numbers = #tpu.dot_dimension_numbers<[1], [0], [0], [1], [0, 0, 1, 1], [], []>} : vector<32x8xf32>, vector<8x4xf32>, vector<32x4xf32> -> vector<32x4xf32>
    "tpu.trace_start"() <{level = 10 : i32, message = "im,sm->is"}> : () -> ()
    %cst_56 = arith.constant dense<0.000000e+00> : vector<8x32xf32>
    %64 = tpu.matmul %52, %63, %cst_56 {dimension_numbers = #tpu.dot_dimension_numbers<[1], [1], [0], [0], [0, 0, 1, 0], [], []>} : vector<8x4xf32>, vector<32x4xf32>, vector<8x32xf32> -> vector<8x32xf32>
    "tpu.trace_stop"() : () -> ()
    %c0_57 = arith.constant 0 : index
    %c0_58 = arith.constant 0 : index
    %65 = vector.load %arg16[%c0_57, %c0_58] : memref<8x32xf32, #tpu.memory_space<vmem>>, vector<8x32xf32>
    %66 = arith.mulf %64, %65 : vector<8x32xf32>
    %c0_59 = arith.constant 0 : index
    %c0_60 = arith.constant 0 : index
    %67 = vector.load %arg17[%c0_59, %c0_60] : memref<32x16xf32, #tpu.memory_space<vmem>>, vector<32x16xf32>
    %cst_61 = arith.constant dense<0.000000e+00> : vector<8x16xf32>
    %68 = tpu.matmul %66, %67, %cst_61 {dimension_numbers = #tpu.dot_dimension_numbers<[1], [0], [0], [1], [0, 0, 1, 1], [], []>} : vector<8x32xf32>, vector<32x16xf32>, vector<8x16xf32> -> vector<8x16xf32>
    %cst_62 = arith.constant 0.000000e+00 : f32
    %69 = vector.broadcast %cst_62 : f32 to vector<8x16xf32>
    %70 = arith.subf %69, %68 : vector<8x16xf32>
    %71 = math.exp %70 : vector<8x16xf32>
    %cst_63 = arith.constant 1.000000e+00 : f32
    %72 = vector.broadcast %cst_63 : f32 to vector<8x16xf32>
    %73 = arith.addf %72, %71 : vector<8x16xf32>
    %74 = tpu.reciprocal %73 {approx = true} : vector<8x16xf32> -> vector<8x16xf32>
    %c0_64 = arith.constant 0 : index
    %c0_65 = arith.constant 0 : index
    %75 = vector.load %arg18[%c0_64, %c0_65] : memref<8x16xf32, #tpu.memory_space<vmem>>, vector<8x16xf32>
    tpu.vector_store %arg18[%c0_64, %c0_65], %74 {strides = array<i32>} : memref<8x16xf32, #tpu.memory_space<vmem>>, vector<8x16xf32>,
    %c0_66 = arith.constant 0 : index
    %c0_67 = arith.constant 0 : index
    %76 = vector.load %arg1[%c0_66, %c0_67] : memref<8x16xf32, #tpu.memory_space<vmem>>, vector<8x16xf32>
    %77 = arith.subf %74, %76 : vector<8x16xf32>
    %78 = arith.mulf %77, %77 : vector<8x16xf32>
    %79 = vector.shape_cast %78 : vector<8x16xf32> to vector<1x8x16xf32>
    %cst_68 = arith.constant dense<0.000000e+00> : vector<1xf32>
    %80 = vector.multi_reduction <add>, %79, %cst_68 [1, 2] : vector<1x8x16xf32> to vector<1xf32>
    %81 = vector.shape_cast %80 : vector<1xf32> to vector<1x1x1xf32>
    %82 = vector.extract %81[0, 0, 0] : f32 from vector<1x1x1xf32>
    %cst_69 = arith.constant 2.000000e+00 : f32
    %83 = arith.divf %82, %cst_69 : f32
    %84 = vector.broadcast %83 : f32 to vector<1x1xf32>
    %c0_70 = arith.constant 0 : index
    %c0_71 = arith.constant 0 : index
    %85 = vector.load %arg19[%c0_70, %c0_71] : memref<1x1xf32, #tpu.memory_space<vmem>>, vector<1x1xf32>
    tpu.vector_store %arg19[%c0_70, %c0_71], %84 {strides = array<i32>} : memref<1x1xf32, #tpu.memory_space<vmem>>, vector<1x1xf32>,
    return
  }
}

</mosaic_0001>

<llo_original>
// kernel: tr_forward.1
$region0: #{tr_forward.1}
  #allocation0 [shape = 'u32[]', space=smem, size = 0x4, offset = 0x4, fixed_abs, tag = 'smem constant byte address 0x4 - core index']
  #allocation1 [shape = 'u32[144,128]{1,0:T(1,128)}', space=vmem, size = 0x12000, scoped, tag = 'internal scratch']
  %s0 = inlined_call_operand.vmem [shape: f32[3,8,16], index: 0, kind: input, shape index: {}]
  %s1 = inlined_call_operand.vmem [shape: f32[8,16], index: 1, kind: input, shape index: {}]
  %s2 = inlined_call_operand.vmem [shape: f32[3,16,32], index: 2, kind: input, shape index: {}]
  %s3 = inlined_call_operand.vmem [shape: f32[3,1,32], index: 3, kind: input, shape index: {}]
  %s4 = inlined_call_operand.vmem [shape: f32[3,32,4], index: 4, kind: input, shape index: {}]
  %s5 = inlined_call_operand.vmem [shape: f32[3,1,4], index: 5, kind: input, shape index: {}]
  %s6 = inlined_call_operand.vmem [shape: f32[3,4,32], index: 6, kind: input, shape index: {}]
  %s7 = inlined_call_operand.vmem [shape: f32[3,1,32], index: 7, kind: input, shape index: {}]
  %s8 = inlined_call_operand.vmem [shape: f32[3,32,4], index: 8, kind: input, shape index: {}]
  %s9 = inlined_call_operand.vmem [shape: f32[3,1,4], index: 9, kind: input, shape index: {}]
  %s10 = inlined_call_operand.vmem [shape: f32[4,4], index: 10, kind: input, shape index: {}]
  %s11 = inlined_call_operand.vmem [shape: f32[4,8], index: 11, kind: input, shape index: {}]
  %s12 = inlined_call_operand.vmem [shape: f32[4,8], index: 12, kind: input, shape index: {}]
  %s13 = inlined_call_operand.vmem [shape: f32[8,4], index: 13, kind: input, shape index: {}]
  %s14 = inlined_call_operand.vmem [shape: f32[32,8], index: 14, kind: input, shape index: {}]
  %s15 = inlined_call_operand.vmem [shape: f32[32,8], index: 15, kind: input, shape index: {}]
  %s16 = inlined_call_operand.vmem [shape: f32[8,32], index: 16, kind: input, shape index: {}]
  %s17 = inlined_call_operand.vmem [shape: f32[32,16], index: 17, kind: input, shape index: {}]
  %s18 = inlined_call_operand.vmem [shape: f32[8,16], index: 18, kind: output, shape index: {0}]
  %s19 = inlined_call_operand.hbm [shape: f32[1,1], index: 19, kind: output, shape index: {1}]
  %20 = xla_tuple %s18, %s19
  %s21 = sld [smem:[#allocation0]]
  $region90: #{tr_forward.1} parent=0
    _
  %s23 = ssub.s32 1, %s21
  %s24 = scalar_select 0, %s23, %s21
  $region1: #{tr_forward.1} parent=0
    #allocation2 [shape = 'u8[512]{0}', space=vmem, size = 0x400, scoped, tag = 'output window, operand 1, single buffered']
    #allocation3 [shape = 's32[1]{0}', space=sflag, size = 0x4, scoped, tag = 'scoped memory for tr_forward.1']
    %25 = vsyncpa [#allocation3], 0
    // Predicated region
    $region2: #{tr_forward.1} parent=1 // pred_check
      _
    $region3: #{tr_forward.1} parent=1 // pred_check_branch
      %27 = sbr.rel (0) target = $region5
    $region4: #{tr_forward.1} parent=1 // pred_region
      _
    $region5: #{tr_forward.1} parent=1 // pred_fallthru
      _
    // Predicated region
    $region6: #{tr_forward.1} parent=1 // pred_check
      _
    $region7: #{tr_forward.1} parent=1 // pred_check_branch
      %29 = sbr.rel (0) target = $region9
    $region8: #{tr_forward.1} parent=1 // pred_region
      _
    $region9: #{tr_forward.1} parent=1 // pred_fallthru
      _
    // Predicated region
    $region10: #{tr_forward.1} parent=1 // pred_check
      _
    $region11: #{tr_forward.1} parent=1 // pred_check_branch
      %31 = sbr.rel (0) target = $region13
    $region12: #{tr_forward.1} parent=1 // pred_region
      _
    $region13: #{tr_forward.1} parent=1 // pred_fallthru
      _
    // Predicated region
    $region14: #{tr_forward.1} parent=1 // pred_check
      _
    $region15: #{tr_forward.1} parent=1 // pred_check_branch
      %33 = sbr.rel (0) target = $region17
    $region16: #{tr_forward.1} parent=1 // pred_region
      _
    $region17: #{tr_forward.1} parent=1 // pred_fallthru
      _
    // Predicated region
    $region18: #{tr_forward.1} parent=1 // pred_check
      _
    $region19: #{tr_forward.1} parent=1 // pred_check_branch
      %35 = sbr.rel (0) target = $region21
    $region20: #{tr_forward.1} parent=1 // pred_region
      _
    $region21: #{tr_forward.1} parent=1 // pred_fallthru
      _
    // Predicated region
    $region22: #{tr_forward.1} parent=1 // pred_check
      _
    $region23: #{tr_forward.1} parent=1 // pred_check_branch
      %37 = sbr.rel (0) target = $region25
    $region24: #{tr_forward.1} parent=1 // pred_region
      _
    $region25: #{tr_forward.1} parent=1 // pred_fallthru
      _
    // Predicated region
    $region26: #{tr_forward.1} parent=1 // pred_check
      _
    $region27: #{tr_forward.1} parent=1 // pred_check_branch
      %39 = sbr.rel (0) target = $region29
    $region28: #{tr_forward.1} parent=1 // pred_region
      _
    $region29: #{tr_forward.1} parent=1 // pred_fallthru
      _
    // Predicated region
    $region30: #{tr_forward.1} parent=1 // pred_check
      _
    $region31: #{tr_forward.1} parent=1 // pred_check_branch
      %41 = sbr.rel (0) target = $region33
    $region32: #{tr_forward.1} parent=1 // pred_region
      _
    $region33: #{tr_forward.1} parent=1 // pred_fallthru
      _
    // Predicated region
    $region34: #{tr_forward.1} parent=1 // pred_check
      _
    $region35: #{tr_forward.1} parent=1 // pred_check_branch
      %43 = sbr.rel (0) target = $region37
    $region36: #{tr_forward.1} parent=1 // pred_region
      _
    $region37: #{tr_forward.1} parent=1 // pred_fallthru
      _
    // Predicated region
    $region38: #{tr_forward.1} parent=1 // pred_check
      _
    $region39: #{tr_forward.1} parent=1 // pred_check_branch
      %45 = sbr.rel (0) target = $region41
    $region40: #{tr_forward.1} parent=1 // pred_region
      _
    $region41: #{tr_forward.1} parent=1 // pred_fallthru
      _
    // Predicated region
    $region42: #{tr_forward.1} parent=1 // pred_check
      _
    $region43: #{tr_forward.1} parent=1 // pred_check_branch
      %47 = sbr.rel (0) target = $region45
    $region44: #{tr_forward.1} parent=1 // pred_region
      _
    $region45: #{tr_forward.1} parent=1 // pred_fallthru
      _
    // Predicated region
    $region46: #{tr_forward.1} parent=1 // pred_check
      _
    $region47: #{tr_forward.1} parent=1 // pred_check_branch
      %49 = sbr.rel (0) target = $region49
    $region48: #{tr_forward.1} parent=1 // pred_region
      _
    $region49: #{tr_forward.1} parent=1 // pred_fallthru
      _
    // Predicated region
    $region50: #{tr_forward.1} parent=1 // pred_check
      _
    $region51: #{tr_forward.1} parent=1 // pred_check_branch
      %51 = sbr.rel (0) target = $region53
    $region52: #{tr_forward.1} parent=1 // pred_region
      _
    $region53: #{tr_forward.1} parent=1 // pred_fallthru
      _
    // Predicated region
    $region54: #{tr_forward.1} parent=1 // pred_check
      _
    $region55: #{tr_forward.1} parent=1 // pred_check_branch
      %53 = sbr.rel (0) target = $region57
    $region56: #{tr_forward.1} parent=1 // pred_region
      _
    $region57: #{tr_forward.1} parent=1 // pred_fallthru
      _
    // Predicated region
    $region58: #{tr_forward.1} parent=1 // pred_check
      _
    $region59: #{tr_forward.1} parent=1 // pred_check_branch
      %55 = sbr.rel (0) target = $region61
    $region60: #{tr_forward.1} parent=1 // pred_region
      _
    $region61: #{tr_forward.1} parent=1 // pred_fallthru
      _
    // Predicated region
    $region62: #{tr_forward.1} parent=1 // pred_check
      _
    $region63: #{tr_forward.1} parent=1 // pred_check_branch
      %57 = sbr.rel (0) target = $region65
    $region64: #{tr_forward.1} parent=1 // pred_region
      _
    $region65: #{tr_forward.1} parent=1 // pred_fallthru
      _
    // Predicated region
    $region66: #{tr_forward.1} parent=1 // pred_check
      _
    $region67: #{tr_forward.1} parent=1 // pred_check_branch
      %59 = sbr.rel (0) target = $region69
    $region68: #{tr_forward.1} parent=1 // pred_region
      _
    $region69: #{tr_forward.1} parent=1 // pred_fallthru
      _
    // Predicated region
    $region70: #{tr_forward.1} parent=1 // pred_check
      _
    $region71: #{tr_forward.1} parent=1 // pred_check_branch
      %61 = sbr.rel (0) target = $region73
    $region72: #{tr_forward.1} parent=1 // pred_region
      _
    $region73: #{tr_forward.1} parent=1 // pred_fallthru
      _
    %v62 = vld [vmem:[%s0] sm:$0xff]
    %v63 = vld [vmem:[%s0 + $0x8] sm:$0xff]
    %v64 = vld [vmem:[%s0 + $0x10] sm:$0xff]
    %v65 = vld [vmem:[%s2] sm:$0xff]
    %v66 = vld [vmem:[%s2 + $0x8] sm:$0xff]
    %v67 = vld [vmem:[%s2 + $0x10] sm:$0xff]
    %v68 = vld [vmem:[%s2 + $0x18] sm:$0xff]
    %v69 = vld [vmem:[%s2 + $0x20] sm:$0xff]
    %v70 = vld [vmem:[%s2 + $0x28] sm:$0xff]
    %v71 = vld [vmem:[%s3] sm:$0x1]
    %v72 = vld [vmem:[%s3 + $0x1] sm:$0x1]
    %v73 = vld [vmem:[%s3 + $0x2] sm:$0x1]
    %v77 = vlaneseq
    %v78 = vshrl.u32 %v77, 7
    %v79 = vsub.s32 0, %v78
    %v80 = vrot.slane %v71, %v79
    %v81 = vlaneseq
    %v82 = vshrl.u32 %v81, 7
    %v83 = vsub.s32 0, %v82
    %v84 = vrot.slane %v72, %v83
    %v85 = vlaneseq
    %v86 = vshrl.u32 %v85, 7
    %v87 = vsub.s32 0, %v86
    %v88 = vrot.slane %v73, %v87
    %vm92 = vcmask 130048
    %v94 = vsel %vm92, %v62, 0
    %96 = vmatprep.subr.mxu0 0.0
    %97 = vmatpush1.msra.mxu0 %v65
    %98 = vmatprep.subr.mxu0 0.0
    %99 = vmatpush1.msra.mxu0 %v66
    %100 = vmatprep.subr.mxu0 0.0
    %101 = vmatpush1.msra.mxu0 0.0
    %102 = vmatprep.subr.mxu0 0.0
    %103 = vmatpush1.msra.mxu0 0.0
    %104 = vmatprep.subr.mxu0 0.0
    %105 = vmatpush1.msra.mxu0 0.0
    %106 = vmatprep.subr.mxu0 0.0
    %107 = vmatpush1.msra.mxu0 0.0
    %108 = vmatprep.subr.mxu0 0.0
    %109 = vmatpush1.msra.mxu0 0.0
    %110 = vmatprep.subr.mxu0 0.0
    %111 = vmatpush1.msra.mxu0 0.0
    %112 = vmatprep.subr.mxu0 0.0
    %113 = vmatpush1.msra.mxu0 0.0
    %114 = vmatprep.subr.mxu0 0.0
    %115 = vmatpush1.msra.mxu0 0.0
    %116 = vmatprep.subr.mxu0 0.0
    %117 = vmatpush1.msra.mxu0 0.0
    %118 = vmatprep.subr.mxu0 0.0
    %119 = vmatpush1.msra.mxu0 0.0
    %120 = vmatprep.subr.mxu0 0.0
    %121 = vmatpush1.msra.mxu0 0.0
    %122 = vmatprep.subr.mxu0 0.0
    %123 = vmatpush1.msra.mxu0 0.0
    %124 = vmatprep.subr.mxu0 0.0
    %125 = vmatpush1.msra.mxu0 0.0
    %126 = vmatprep.subr.mxu0 0.0
    %127 = vmatpush1.msra.mxu0 0.0
    %128 = vmatprep.subr.mxu0 0.0
    %129 = vmatpush1.msra.mxu0 0.0
    %130 = vmatprep.subr.mxu0 0.0
    %131 = vmatpush1.msra.mxu0 0.0
    %132 = vmatprep.subr.mxu0 0.0
    %133 = vmatpush1.msra.mxu0 0.0
    %134 = vmatprep.subr.mxu0 0.0
    %135 = vmatpush1.msra.mxu0 0.0
    %136 = vmatprep.subr.mxu0 0.0
    %137 = vmatpush1.msra.mxu0 0.0
    %138 = vmatprep.subr.mxu0 0.0
    %139 = vmatpush1.msra.mxu0 0.0
    %140 = vmatprep.subr.mxu0 0.0
    %141 = vmatpush1.msra.mxu0 0.0
    %142 = vmatprep.subr.mxu0 0.0
    %143 = vmatpush1.msra.mxu0 0.0
    %144 = vmatprep.subr.mxu0 0.0
    %145 = vmatpush1.msra.mxu0 0.0
    %146 = vmatprep.subr.mxu0 0.0
    %147 = vmatpush1.msra.mxu0 0.0
    %148 = vmatprep.subr.mxu0 0.0
    %149 = vmatpush1.msra.mxu0 0.0
    %150 = vmatprep.subr.mxu0 0.0
    %151 = vmatpush1.msra.mxu0 0.0
    %152 = vmatprep.subr.mxu0 0.0
    %153 = vmatpush1.msra.mxu0 0.0
    %154 = vmatprep.subr.mxu0 0.0
    %155 = vmatpush1.msra.mxu0 0.0
    %156 = vmatprep.subr.mxu0 0.0
    %157 = vmatpush1.msra.mxu0 0.0
    %158 = vmatprep.subr.mxu0 0.0
    %159 = vmatpush1.msra.mxu0 0.0
    %160 = vmatprep.mubr.f32.mxu0 0.0
    %161 = vmatmul.mubr.f32.gmra.mrb[0].mxu0 %v94
    %v162 = vpop.f32.mrb[0].mxu0
    %v163 = vadd.f32 %v80, %v162
    %v164 = vpop.f32.mrb[0].mxu0
    %165 = vdwg.mxu0
    %v167 = vsel %vm92, %v63, 0
    %169 = vmatprep.subr.mxu0 0.0
    %170 = vmatpush1.msra.mxu0 %v67
    %171 = vmatprep.subr.mxu0 0.0
    %172 = vmatpush1.msra.mxu0 %v68
    %173 = vmatprep.subr.mxu0 0.0
    %174 = vmatpush1.msra.mxu0 0.0
    %175 = vmatprep.subr.mxu0 0.0
    %176 = vmatpush1.msra.mxu0 0.0
    %177 = vmatprep.subr.mxu0 0.0
    %178 = vmatpush1.msra.mxu0 0.0
    %179 = vmatprep.subr.mxu0 0.0
    %180 = vmatpush1.msra.mxu0 0.0
    %181 = vmatprep.subr.mxu0 0.0
    %182 = vmatpush1.msra.mxu0 0.0
    %183 = vmatprep.subr.mxu0 0.0
    %184 = vmatpush1.msra.mxu0 0.0
    %185 = vmatprep.subr.mxu0 0.0
    %186 = vmatpush1.msra.mxu0 0.0
    %187 = vmatprep.subr.mxu0 0.0
    %188 = vmatpush1.msra.mxu0 0.0
    %189 = vmatprep.subr.mxu0 0.0
    %190 = vmatpush1.msra.mxu0 0.0
    %191 = vmatprep.subr.mxu0 0.0
    %192 = vmatpush1.msra.mxu0 0.0
    %193 = vmatprep.subr.mxu0 0.0
    %194 = vmatpush1.msra.mxu0 0.0
    %195 = vmatprep.subr.mxu0 0.0
    %196 = vmatpush1.msra.mxu0 0.0
    %197 = vmatprep.subr.mxu0 0.0
    %198 = vmatpush1.msra.mxu0 0.0
    %199 = vmatprep.subr.mxu0 0.0
    %200 = vmatpush1.msra.mxu0 0.0
    %201 = vmatprep.subr.mxu0 0.0
    %202 = vmatpush1.msra.mxu0 0.0
    %203 = vmatprep.subr.mxu0 0.0
    %204 = vmatpush1.msra.mxu0 0.0
    %205 = vmatprep.subr.mxu0 0.0
    %206 = vmatpush1.msra.mxu0 0.0
    %207 = vmatprep.subr.mxu0 0.0
    %208 = vmatpush1.msra.mxu0 0.0
    %209 = vmatprep.subr.mxu0 0.0
    %210 = vmatpush1.msra.mxu0 0.0
    %211 = vmatprep.subr.mxu0 0.0
    %212 = vmatpush1.msra.mxu0 0.0
    %213 = vmatprep.subr.mxu0 0.0
    %214 = vmatpush1.msra.mxu0 0.0
    %215 = vmatprep.subr.mxu0 0.0
    %216 = vmatpush1.msra.mxu0 0.0
    %217 = vmatprep.subr.mxu0 0.0
    %218 = vmatpush1.msra.mxu0 0.0
    %219 = vmatprep.subr.mxu0 0.0
    %220 = vmatpush1.msra.mxu0 0.0
    %221 = vmatprep.subr.mxu0 0.0
    %222 = vmatpush1.msra.mxu0 0.0
    %223 = vmatprep.subr.mxu0 0.0
    %224 = vmatpush1.msra.mxu0 0.0
    %225 = vmatprep.subr.mxu0 0.0
    %226 = vmatpush1.msra.mxu0 0.0
    %227 = vmatprep.subr.mxu0 0.0
    %228 = vmatpush1.msra.mxu0 0.0
    %229 = vmatprep.subr.mxu0 0.0
    %230 = vmatpush1.msra.mxu0 0.0
    %231 = vmatprep.subr.mxu0 0.0
    %232 = vmatpush1.msra.mxu0 0.0
    %233 = vmatprep.mubr.f32.mxu0 0.0
    %234 = vmatmul.mubr.f32.gmra.mrb[0].mxu0 %v167
    %v235 = vpop.f32.mrb[0].mxu0
    %v236 = vadd.f32 %v84, %v235
    %v237 = vpop.f32.mrb[0].mxu0
    %238 = vdwg.mxu0
    %v240 = vsel %vm92, %v64, 0
    %242 = vmatprep.subr.mxu0 0.0
    %243 = vmatpush1.msra.mxu0 %v69
    %244 = vmatprep.subr.mxu0 0.0
    %245 = vmatpush1.msra.mxu0 %v70
    %246 = vmatprep.subr.mxu0 0.0
    %247 = vmatpush1.msra.mxu0 0.0
    %248 = vmatprep.subr.mxu0 0.0
    %249 = vmatpush1.msra.mxu0 0.0
    %250 = vmatprep.subr.mxu0 0.0
    %251 = vmatpush1.msra.mxu0 0.0
    %252 = vmatprep.subr.mxu0 0.0
    %253 = vmatpush1.msra.mxu0 0.0
    %254 = vmatprep.subr.mxu0 0.0
    %255 = vmatpush1.msra.mxu0 0.0
    %256 = vmatprep.subr.mxu0 0.0
    %257 = vmatpush1.msra.mxu0 0.0
    %258 = vmatprep.subr.mxu0 0.0
    %259 = vmatpush1.msra.mxu0 0.0
    %260 = vmatprep.subr.mxu0 0.0
    %261 = vmatpush1.msra.mxu0 0.0
    %262 = vmatprep.subr.mxu0 0.0
    %263 = vmatpush1.msra.mxu0 0.0
    %264 = vmatprep.subr.mxu0 0.0
    %265 = vmatpush1.msra.mxu0 0.0
    %266 = vmatprep.subr.mxu0 0.0
    %267 = vmatpush1.msra.mxu0 0.0
    %268 = vmatprep.subr.mxu0 0.0
    %269 = vmatpush1.msra.mxu0 0.0
    %270 = vmatprep.subr.mxu0 0.0
    %271 = vmatpush1.msra.mxu0 0.0
    %272 = vmatprep.subr.mxu0 0.0
    %273 = vmatpush1.msra.mxu0 0.0
    %274 = vmatprep.subr.mxu0 0.0
    %275 = vmatpush1.msra.mxu0 0.0
    %276 = vmatprep.subr.mxu0 0.0
    %277 = vmatpush1.msra.mxu0 0.0
    %278 = vmatprep.subr.mxu0 0.0
    %279 = vmatpush1.msra.mxu0 0.0
    %280 = vmatprep.subr.mxu0 0.0
    %281 = vmatpush1.msra.mxu0 0.0
    %282 = vmatprep.subr.mxu0 0.0
    %283 = vmatpush1.msra.mxu0 0.0
    %284 = vmatprep.subr.mxu0 0.0
    %285 = vmatpush1.msra.mxu0 0.0
    %286 = vmatprep.subr.mxu0 0.0
    %287 = vmatpush1.msra.mxu0 0.0
    %288 = vmatprep.subr.mxu0 0.0
    %289 = vmatpush1.msra.mxu0 0.0
    %290 = vmatprep.subr.mxu0 0.0
    %291 = vmatpush1.msra.mxu0 0.0
    %292 = vmatprep.subr.mxu0 0.0
    %293 = vmatpush1.msra.mxu0 0.0
    %294 = vmatprep.subr.mxu0 0.0
    %295 = vmatpush1.msra.mxu0 0.0
    %296 = vmatprep.subr.mxu0 0.0
    %297 = vmatpush1.msra.mxu0 0.0
    %298 = vmatprep.subr.mxu0 0.0
    %299 = vmatpush1.msra.mxu0 0.0
    %300 = vmatprep.subr.mxu0 0.0
    %301 = vmatpush1.msra.mxu0 0.0
    %302 = vmatprep.subr.mxu0 0.0
    %303 = vmatpush1.msra.mxu0 0.0
    %304 = vmatprep.subr.mxu0 0.0
    %305 = vmatpush1.msra.mxu0 0.0
    %306 = vmatprep.mubr.f32.mxu0 0.0
    %307 = vmatmul.mubr.f32.gmra.mrb[0].mxu0 %v240
    %v308 = vpop.f32.mrb[0].mxu0
    %v309 = vadd.f32 %v88, %v308
    %v310 = vpop.f32.mrb[0].mxu0
    %311 = vdwg.mxu0
    %vm312 = vcmp.gt.f32.partialorder %v163, 0.0
    %vm313 = vcmp.gt.f32.partialorder %v236, 0.0
    %vm314 = vcmp.gt.f32.partialorder %v309, 0.0
    %v315 = vmin.f32 %v163, 0.0
    %v316 = vmin.f32 %v236, 0.0
    %v317 = vmin.f32 %v309, 0.0
    %v318 = vmul.f32 %v315, 1.442695
    %v319 = vpow.pop %v318
    %v320 = vmul.f32 %v316, 1.442695
    %v321 = vpow.pop %v320
    %v322 = vmul.f32 %v317, 1.442695
    %v323 = vpow.pop %v322
    %v324 = vsub.f32 %v319, 1.0
    %v325 = vsub.f32 %v321, 1.0
    %v326 = vsub.f32 %v323, 1.0
    %v327 = vsel %vm312, %v163, %v324
    %v328 = vsel %vm313, %v236, %v325
    %v329 = vsel %vm314, %v309, %v326
    %v330 = vld [vmem:[%s4] sm:$0xff]
    %v331 = vld [vmem:[%s4 + $0x8] sm:$0xff]
    %v332 = vld [vmem:[%s4 + $0x10] sm:$0xff]
    %v333 = vld [vmem:[%s4 + $0x18] sm:$0xff]
    %v334 = vld [vmem:[%s4 + $0x20] sm:$0xff]
    %v335 = vld [vmem:[%s4 + $0x28] sm:$0xff]
    %v336 = vld [vmem:[%s4 + $0x30] sm:$0xff]
    %v337 = vld [vmem:[%s4 + $0x38] sm:$0xff]
    %v338 = vld [vmem:[%s4 + $0x40] sm:$0xff]
    %v339 = vld [vmem:[%s4 + $0x48] sm:$0xff]
    %v340 = vld [vmem:[%s4 + $0x50] sm:$0xff]
    %v341 = vld [vmem:[%s4 + $0x58] sm:$0xff]
    %v342 = vld [vmem:[%s5] sm:$0x1]
    %v343 = vld [vmem:[%s5 + $0x1] sm:$0x1]
    %v344 = vld [vmem:[%s5 + $0x2] sm:$0x1]
    %v348 = vlaneseq
    %v349 = vshrl.u32 %v348, 7
    %v350 = vsub.s32 0, %v349
    %v351 = vrot.slane %v342, %v350
    %v352 = vlaneseq
    %v353 = vshrl.u32 %v352, 7
    %v354 = vsub.s32 0, %v353
    %v355 = vrot.slane %v343, %v354
    %v356 = vlaneseq
    %v357 = vshrl.u32 %v356, 7
    %v358 = vsub.s32 0, %v357
    %v359 = vrot.slane %v344, %v358
    %vm363 = vcmask 261120
    %v365 = vsel %vm363, %v327, 0
    %367 = vmatprep.subr.mxu0 0.0
    %368 = vmatpush1.msra.mxu0 %v330
    %369 = vmatprep.subr.mxu0 0.0
    %370 = vmatpush1.msra.mxu0 %v331
    %371 = vmatprep.subr.mxu0 0.0
    %372 = vmatpush1.msra.mxu0 %v332
    %373 = vmatprep.subr.mxu0 0.0
    %374 = vmatpush1.msra.mxu0 %v333
    %375 = vmatprep.subr.mxu0 0.0
    %376 = vmatpush1.msra.mxu0 0.0
    %377 = vmatprep.subr.mxu0 0.0
    %378 = vmatpush1.msra.mxu0 0.0
    %379 = vmatprep.subr.mxu0 0.0
    %380 = vmatpush1.msra.mxu0 0.0
    %381 = vmatprep.subr.mxu0 0.0
    %382 = vmatpush1.msra.mxu0 0.0
    %383 = vmatprep.subr.mxu0 0.0
    %384 = vmatpush1.msra.mxu0 0.0
    %385 = vmatprep.subr.mxu0 0.0
    %386 = vmatpush1.msra.mxu0 0.0
    %387 = vmatprep.subr.mxu0 0.0
    %388 = vmatpush1.msra.mxu0 0.0
    %389 = vmatprep.subr.mxu0 0.0
    %390 = vmatpush1.msra.mxu0 0.0
    %391 = vmatprep.subr.mxu0 0.0
    %392 = vmatpush1.msra.mxu0 0.0
    %393 = vmatprep.subr.mxu0 0.0
    %394 = vmatpush1.msra.mxu0 0.0
    %395 = vmatprep.subr.mxu0 0.0
    %396 = vmatpush1.msra.mxu0 0.0
    %397 = vmatprep.subr.mxu0 0.0
    %398 = vmatpush1.msra.mxu0 0.0
    %399 = vmatprep.subr.mxu0 0.0
    %400 = vmatpush1.msra.mxu0 0.0
    %401 = vmatprep.subr.mxu0 0.0
    %402 = vmatpush1.msra.mxu0 0.0
    %403 = vmatprep.subr.mxu0 0.0
    %404 = vmatpush1.msra.mxu0 0.0
    %405 = vmatprep.subr.mxu0 0.0
    %406 = vmatpush1.msra.mxu0 0.0
    %407 = vmatprep.subr.mxu0 0.0
    %408 = vmatpush1.msra.mxu0 0.0
    %409 = vmatprep.subr.mxu0 0.0
    %410 = vmatpush1.msra.mxu0 0.0
    %411 = vmatprep.subr.mxu0 0.0
    %412 = vmatpush1.msra.mxu0 0.0
    %413 = vmatprep.subr.mxu0 0.0
    %414 = vmatpush1.msra.mxu0 0.0
    %415 = vmatprep.subr.mxu0 0.0
    %416 = vmatpush1.msra.mxu0 0.0
    %417 = vmatprep.subr.mxu0 0.0
    %418 = vmatpush1.msra.mxu0 0.0
    %419 = vmatprep.subr.mxu0 0.0
    %420 = vmatpush1.msra.mxu0 0.0
    %421 = vmatprep.subr.mxu0 0.0
    %422 = vmatpush1.msra.mxu0 0.0
    %423 = vmatprep.subr.mxu0 0.0
    %424 = vmatpush1.msra.mxu0 0.0
    %425 = vmatprep.subr.mxu0 0.0
    %426 = vmatpush1.msra.mxu0 0.0
    %427 = vmatprep.subr.mxu0 0.0
    %428 = vmatpush1.msra.mxu0 0.0
    %429 = vmatprep.subr.mxu0 0.0
    %430 = vmatpush1.msra.mxu0 0.0
    %431 = vmatprep.mubr.f32.mxu0 0.0
    %432 = vmatmul.mubr.f32.gmra.mrb[0].mxu0 %v365
    %v433 = vpop.f32.mrb[0].mxu0
    %v434 = vadd.f32 %v351, %v433
    %v435 = vpop.f32.mrb[0].mxu0
    %436 = vdwg.mxu0
    %v438 = vsel %vm363, %v328, 0
    %440 = vmatprep.subr.mxu0 0.0
    %441 = vmatpush1.msra.mxu0 %v334
    %442 = vmatprep.subr.mxu0 0.0
    %443 = vmatpush1.msra.mxu0 %v335
    %444 = vmatprep.subr.mxu0 0.0
    %445 = vmatpush1.msra.mxu0 %v336
    %446 = vmatprep.subr.mxu0 0.0
    %447 = vmatpush1.msra.mxu0 %v337
    %448 = vmatprep.subr.mxu0 0.0
    %449 = vmatpush1.msra.mxu0 0.0
    %450 = vmatprep.subr.mxu0 0.0
    %451 = vmatpush1.msra.mxu0 0.0
    %452 = vmatprep.subr.mxu0 0.0
    %453 = vmatpush1.msra.mxu0 0.0
    %454 = vmatprep.subr.mxu0 0.0
    %455 = vmatpush1.msra.mxu0 0.0
    %456 = vmatprep.subr.mxu0 0.0
    %457 = vmatpush1.msra.mxu0 0.0
    %458 = vmatprep.subr.mxu0 0.0
    %459 = vmatpush1.msra.mxu0 0.0
    %460 = vmatprep.subr.mxu0 0.0
    %461 = vmatpush1.msra.mxu0 0.0
    %462 = vmatprep.subr.mxu0 0.0
    %463 = vmatpush1.msra.mxu0 0.0
    %464 = vmatprep.subr.mxu0 0.0
    %465 = vmatpush1.msra.mxu0 0.0
    %466 = vmatprep.subr.mxu0 0.0
    %467 = vmatpush1.msra.mxu0 0.0
    %468 = vmatprep.subr.mxu0 0.0
    %469 = vmatpush1.msra.mxu0 0.0
    %470 = vmatprep.subr.mxu0 0.0
    %471 = vmatpush1.msra.mxu0 0.0
    %472 = vmatprep.subr.mxu0 0.0
    %473 = vmatpush1.msra.mxu0 0.0
    %474 = vmatprep.subr.mxu0 0.0
    %475 = vmatpush1.msra.mxu0 0.0
    %476 = vmatprep.subr.mxu0 0.0
    %477 = vmatpush1.msra.mxu0 0.0
    %478 = vmatprep.subr.mxu0 0.0
    %479 = vmatpush1.msra.mxu0 0.0
    %480 = vmatprep.subr.mxu0 0.0
    %481 = vmatpush1.msra.mxu0 0.0
    %482 = vmatprep.subr.mxu0 0.0
    %483 = vmatpush1.msra.mxu0 0.0
    %484 = vmatprep.subr.mxu0 0.0
    %485 = vmatpush1.msra.mxu0 0.0
    %486 = vmatprep.subr.mxu0 0.0
    %487 = vmatpush1.msra.mxu0 0.0
    %488 = vmatprep.subr.mxu0 0.0
    %489 = vmatpush1.msra.mxu0 0.0
    %490 = vmatprep.subr.mxu0 0.0
    %491 = vmatpush1.msra.mxu0 0.0
    %492 = vmatprep.subr.mxu0 0.0
    %493 = vmatpush1.msra.mxu0 0.0
    %494 = vmatprep.subr.mxu0 0.0
    %495 = vmatpush1.msra.mxu0 0.0
    %496 = vmatprep.subr.mxu0 0.0
    %497 = vmatpush1.msra.mxu0 0.0
    %498 = vmatprep.subr.mxu0 0.0
    %499 = vmatpush1.msra.mxu0 0.0
    %500 = vmatprep.subr.mxu0 0.0
    %501 = vmatpush1.msra.mxu0 0.0
    %502 = vmatprep.subr.mxu0 0.0
    %503 = vmatpush1.msra.mxu0 0.0
    %504 = vmatprep.mubr.f32.mxu0 0.0
    %505 = vmatmul.mubr.f32.gmra.mrb[0].mxu0 %v438
    %v506 = vpop.f32.mrb[0].mxu0
    %v507 = vadd.f32 %v355, %v506
    %v508 = vpop.f32.mrb[0].mxu0
    %509 = vdwg.mxu0
    %v511 = vsel %vm363, %v329, 0
    %513 = vmatprep.subr.mxu0 0.0
    %514 = vmatpush1.msra.mxu0 %v338
    %515 = vmatprep.subr.mxu0 0.0
    %516 = vmatpush1.msra.mxu0 %v339
    %517 = vmatprep.subr.mxu0 0.0
    %518 = vmatpush1.msra.mxu0 %v340
    %519 = vmatprep.subr.mxu0 0.0
    %520 = vmatpush1.msra.mxu0 %v341
    %521 = vmatprep.subr.mxu0 0.0
    %522 = vmatpush1.msra.mxu0 0.0
    %523 = vmatprep.subr.mxu0 0.0
    %524 = vmatpush1.msra.mxu0 0.0
    %525 = vmatprep.subr.mxu0 0.0
    %526 = vmatpush1.msra.mxu0 0.0
    %527 = vmatprep.subr.mxu0 0.0
    %528 = vmatpush1.msra.mxu0 0.0
    %529 = vmatprep.subr.mxu0 0.0
    %530 = vmatpush1.msra.mxu0 0.0
    %531 = vmatprep.subr.mxu0 0.0
    %532 = vmatpush1.msra.mxu0 0.0
    %533 = vmatprep.subr.mxu0 0.0
    %534 = vmatpush1.msra.mxu0 0.0
    %535 = vmatprep.subr.mxu0 0.0
    %536 = vmatpush1.msra.mxu0 0.0
    %537 = vmatprep.subr.mxu0 0.0
    %538 = vmatpush1.msra.mxu0 0.0
    %539 = vmatprep.subr.mxu0 0.0
    %540 = vmatpush1.msra.mxu0 0.0
    %541 = vmatprep.subr.mxu0 0.0
    %542 = vmatpush1.msra.mxu0 0.0
    %543 = vmatprep.subr.mxu0 0.0
    %544 = vmatpush1.msra.mxu0 0.0
    %545 = vmatprep.subr.mxu0 0.0
    %546 = vmatpush1.msra.mxu0 0.0
    %547 = vmatprep.subr.mxu0 0.0
    %548 = vmatpush1.msra.mxu0 0.0
    %549 = vmatprep.subr.mxu0 0.0
    %550 = vmatpush1.msra.mxu0 0.0
    %551 = vmatprep.subr.mxu0 0.0
    %552 = vmatpush1.msra.mxu0 0.0
    %553 = vmatprep.subr.mxu0 0.0
    %554 = vmatpush1.msra.mxu0 0.0
    %555 = vmatprep.subr.mxu0 0.0
    %556 = vmatpush1.msra.mxu0 0.0
    %557 = vmatprep.subr.mxu0 0.0
    %558 = vmatpush1.msra.mxu0 0.0
    %559 = vmatprep.subr.mxu0 0.0
    %560 = vmatpush1.msra.mxu0 0.0
    %561 = vmatprep.subr.mxu0 0.0
    %562 = vmatpush1.msra.mxu0 0.0
    %563 = vmatprep.subr.mxu0 0.0
    %564 = vmatpush1.msra.mxu0 0.0
    %565 = vmatprep.subr.mxu0 0.0
    %566 = vmatpush1.msra.mxu0 0.0
    %567 = vmatprep.subr.mxu0 0.0
    %568 = vmatpush1.msra.mxu0 0.0
    %569 = vmatprep.subr.mxu0 0.0
    %570 = vmatpush1.msra.mxu0 0.0
    %571 = vmatprep.subr.mxu0 0.0
    %572 = vmatpush1.msra.mxu0 0.0
    %573 = vmatprep.subr.mxu0 0.0
    %574 = vmatpush1.msra.mxu0 0.0
    %575 = vmatprep.subr.mxu0 0.0
    %576 = vmatpush1.msra.mxu0 0.0
    %577 = vmatprep.mubr.f32.mxu0 0.0
    %578 = vmatmul.mubr.f32.gmra.mrb[0].mxu0 %v511
    %v579 = vpop.f32.mrb[0].mxu0
    %v580 = vadd.f32 %v359, %v579
    %v581 = vpop.f32.mrb[0].mxu0
    %582 = vdwg.mxu0
    %vm583 = vcmp.gt.f32.partialorder %v434, 0.0
    %vm584 = vcmp.gt.f32.partialorder %v507, 0.0
    %vm585 = vcmp.gt.f32.partialorder %v580, 0.0
    %v586 = vmin.f32 %v434, 0.0
    %v587 = vmin.f32 %v507, 0.0
    %v588 = vmin.f32 %v580, 0.0
    %v589 = vmul.f32 %v586, 1.442695
    %v590 = vpow.pop %v589
    %v591 = vmul.f32 %v587, 1.442695
    %v592 = vpow.pop %v591
    %v593 = vmul.f32 %v588, 1.442695
    %v594 = vpow.pop %v593
    %v595 = vsub.f32 %v590, 1.0
    %v596 = vsub.f32 %v592, 1.0
    %v597 = vsub.f32 %v594, 1.0
    %v598 = vsel %vm583, %v434, %v595
    %v599 = vsel %vm584, %v507, %v596
    %v600 = vsel %vm585, %v580, %v597
    %v601 = vld [vmem:[%s6] sm:$0xf]
    %v602 = vld [vmem:[%s6 + $0x4] sm:$0xf]
    %v603 = vld [vmem:[%s6 + $0x8] sm:$0xf]
    %v604 = vld [vmem:[%s7] sm:$0x1]
    %v605 = vld [vmem:[%s7 + $0x1] sm:$0x1]
    %v606 = vld [vmem:[%s7 + $0x2] sm:$0x1]
    %v610 = vlaneseq
    %v611 = vshrl.u32 %v610, 7
    %v612 = vsub.s32 0, %v611
    %v613 = vrot.slane %v604, %v612
    %v614 = vlaneseq
    %v615 = vshrl.u32 %v614, 7
    %v616 = vsub.s32 0, %v615
    %v617 = vrot.slane %v605, %v616
    %v618 = vlaneseq
    %v619 = vshrl.u32 %v618, 7
    %v620 = vsub.s32 0, %v619
    %v621 = vrot.slane %v606, %v620
    %vm625 = vcmask 31744
    %v627 = vsel %vm625, %v598, 0
    %vm629 = vcmask 1043456
    %v631 = vsel %vm629, %v601, 0
    %633 = vmatprep.subr.mxu0 0.0
    %634 = vmatpush1.msra.mxu0 %v631
    %635 = vmatprep.subr.mxu0 0.0
    %636 = vmatpush1.msra.mxu0 0.0
    %637 = vmatprep.subr.mxu0 0.0
    %638 = vmatpush1.msra.mxu0 0.0
    %639 = vmatprep.subr.mxu0 0.0
    %640 = vmatpush1.msra.mxu0 0.0
    %641 = vmatprep.subr.mxu0 0.0
    %642 = vmatpush1.msra.mxu0 0.0
    %643 = vmatprep.subr.mxu0 0.0
    %644 = vmatpush1.msra.mxu0 0.0
    %645 = vmatprep.subr.mxu0 0.0
    %646 = vmatpush1.msra.mxu0 0.0
    %647 = vmatprep.subr.mxu0 0.0
    %648 = vmatpush1.msra.mxu0 0.0
    %649 = vmatprep.subr.mxu0 0.0
    %650 = vmatpush1.msra.mxu0 0.0
    %651 = vmatprep.subr.mxu0 0.0
    %652 = vmatpush1.msra.mxu0 0.0
    %653 = vmatprep.subr.mxu0 0.0
    %654 = vmatpush1.msra.mxu0 0.0
    %655 = vmatprep.subr.mxu0 0.0
    %656 = vmatpush1.msra.mxu0 0.0
    %657 = vmatprep.subr.mxu0 0.0
    %658 = vmatpush1.msra.mxu0 0.0
    %659 = vmatprep.subr.mxu0 0.0
    %660 = vmatpush1.msra.mxu0 0.0
    %661 = vmatprep.subr.mxu0 0.0
    %662 = vmatpush1.msra.mxu0 0.0
    %663 = vmatprep.subr.mxu0 0.0
    %664 = vmatpush1.msra.mxu0 0.0
    %665 = vmatprep.subr.mxu0 0.0
    %666 = vmatpush1.msra.mxu0 0.0
    %667 = vmatprep.subr.mxu0 0.0
    %668 = vmatpush1.msra.mxu0 0.0
    %669 = vmatprep.subr.mxu0 0.0
    %670 = vmatpush1.msra.mxu0 0.0
    %671 = vmatprep.subr.mxu0 0.0
    %672 = vmatpush1.msra.mxu0 0.0
    %673 = vmatprep.subr.mxu0 0.0
    %674 = vmatpush1.msra.mxu0 0.0
    %675 = vmatprep.subr.mxu0 0.0
    %676 = vmatpush1.msra.mxu0 0.0
    %677 = vmatprep.subr.mxu0 0.0
    %678 = vmatpush1.msra.mxu0 0.0
    %679 = vmatprep.subr.mxu0 0.0
    %680 = vmatpush1.msra.mxu0 0.0
    %681 = vmatprep.subr.mxu0 0.0
    %682 = vmatpush1.msra.mxu0 0.0
    %683 = vmatprep.subr.mxu0 0.0
    %684 = vmatpush1.msra.mxu0 0.0
    %685 = vmatprep.subr.mxu0 0.0
    %686 = vmatpush1.msra.mxu0 0.0
    %687 = vmatprep.subr.mxu0 0.0
    %688 = vmatpush1.msra.mxu0 0.0
    %689 = vmatprep.subr.mxu0 0.0
    %690 = vmatpush1.msra.mxu0 0.0
    %691 = vmatprep.subr.mxu0 0.0
    %692 = vmatpush1.msra.mxu0 0.0
    %693 = vmatprep.subr.mxu0 0.0
    %694 = vmatpush1.msra.mxu0 0.0
    %695 = vmatprep.subr.mxu0 0.0
    %696 = vmatpush1.msra.mxu0 0.0
    %697 = vmatprep.mubr.f32.mxu0 0.0
    %698 = vmatmul.mubr.f32.gmra.mrb[0].mxu0 %v627
    %v699 = vpop.f32.mrb[0].mxu0
    %v700 = vadd.f32 %v613, %v699
    %v701 = vpop.f32.mrb[0].mxu0
    %702 = vdwg.mxu0
    %v704 = vsel %vm625, %v599, 0
    %v707 = vsel %vm629, %v602, 0
    %709 = vmatprep.subr.mxu0 0.0
    %710 = vmatpush1.msra.mxu0 %v707
    %711 = vmatprep.subr.mxu0 0.0
    %712 = vmatpush1.msra.mxu0 0.0
    %713 = vmatprep.subr.mxu0 0.0
    %714 = vmatpush1.msra.mxu0 0.0
    %715 = vmatprep.subr.mxu0 0.0
    %716 = vmatpush1.msra.mxu0 0.0
    %717 = vmatprep.subr.mxu0 0.0
    %718 = vmatpush1.msra.mxu0 0.0
    %719 = vmatprep.subr.mxu0 0.0
    %720 = vmatpush1.msra.mxu0 0.0
    %721 = vmatprep.subr.mxu0 0.0
    %722 = vmatpush1.msra.mxu0 0.0
    %723 = vmatprep.subr.mxu0 0.0
    %724 = vmatpush1.msra.mxu0 0.0
    %725 = vmatprep.subr.mxu0 0.0
    %726 = vmatpush1.msra.mxu0 0.0
    %727 = vmatprep.subr.mxu0 0.0
    %728 = vmatpush1.msra.mxu0 0.0
    %729 = vmatprep.subr.mxu0 0.0
    %730 = vmatpush1.msra.mxu0 0.0
    %731 = vmatprep.subr.mxu0 0.0
    %732 = vmatpush1.msra.mxu0 0.0
    %733 = vmatprep.subr.mxu0 0.0
    %734 = vmatpush1.msra.mxu0 0.0
    %735 = vmatprep.subr.mxu0 0.0
    %736 = vmatpush1.msra.mxu0 0.0
    %737 = vmatprep.subr.mxu0 0.0
    %738 = vmatpush1.msra.mxu0 0.0
    %739 = vmatprep.subr.mxu0 0.0
    %740 = vmatpush1.msra.mxu0 0.0
    %741 = vmatprep.subr.mxu0 0.0
    %742 = vmatpush1.msra.mxu0 0.0
    %743 = vmatprep.subr.mxu0 0.0
    %744 = vmatpush1.msra.mxu0 0.0
    %745 = vmatprep.subr.mxu0 0.0
    %746 = vmatpush1.msra.mxu0 0.0
    %747 = vmatprep.subr.mxu0 0.0
    %748 = vmatpush1.msra.mxu0 0.0
    %749 = vmatprep.subr.mxu0 0.0
    %750 = vmatpush1.msra.mxu0 0.0
    %751 = vmatprep.subr.mxu0 0.0
    %752 = vmatpush1.msra.mxu0 0.0
    %753 = vmatprep.subr.mxu0 0.0
    %754 = vmatpush1.msra.mxu0 0.0
    %755 = vmatprep.subr.mxu0 0.0
    %756 = vmatpush1.msra.mxu0 0.0
    %757 = vmatprep.subr.mxu0 0.0
    %758 = vmatpush1.msra.mxu0 0.0
    %759 = vmatprep.subr.mxu0 0.0
    %760 = vmatpush1.msra.mxu0 0.0
    %761 = vmatprep.subr.mxu0 0.0
    %762 = vmatpush1.msra.mxu0 0.0
    %763 = vmatprep.subr.mxu0 0.0
    %764 = vmatpush1.msra.mxu0 0.0
    %765 = vmatprep.subr.mxu0 0.0
    %766 = vmatpush1.msra.mxu0 0.0
    %767 = vmatprep.subr.mxu0 0.0
    %768 = vmatpush1.msra.mxu0 0.0
    %769 = vmatprep.subr.mxu0 0.0
    %770 = vmatpush1.msra.mxu0 0.0
    %771 = vmatprep.subr.mxu0 0.0
    %772 = vmatpush1.msra.mxu0 0.0
    %773 = vmatprep.mubr.f32.mxu0 0.0
    %774 = vmatmul.mubr.f32.gmra.mrb[0].mxu0 %v704
    %v775 = vpop.f32.mrb[0].mxu0
    %v776 = vadd.f32 %v617, %v775
    %v777 = vpop.f32.mrb[0].mxu0
    %778 = vdwg.mxu0
    %v780 = vsel %vm625, %v600, 0
    %v783 = vsel %vm629, %v603, 0
    %785 = vmatprep.subr.mxu0 0.0
    %786 = vmatpush1.msra.mxu0 %v783
    %787 = vmatprep.subr.mxu0 0.0
    %788 = vmatpush1.msra.mxu0 0.0
    %789 = vmatprep.subr.mxu0 0.0
    %790 = vmatpush1.msra.mxu0 0.0
    %791 = vmatprep.subr.mxu0 0.0
    %792 = vmatpush1.msra.mxu0 0.0
    %793 = vmatprep.subr.mxu0 0.0
    %794 = vmatpush1.msra.mxu0 0.0
    %795 = vmatprep.subr.mxu0 0.0
    %796 = vmatpush1.msra.mxu0 0.0
    %797 = vmatprep.subr.mxu0 0.0
    %798 = vmatpush1.msra.mxu0 0.0
    %799 = vmatprep.subr.mxu0 0.0
    %800 = vmatpush1.msra.mxu0 0.0
    %801 = vmatprep.subr.mxu0 0.0
    %802 = vmatpush1.msra.mxu0 0.0
    %803 = vmatprep.subr.mxu0 0.0
    %804 = vmatpush1.msra.mxu0 0.0
    %805 = vmatprep.subr.mxu0 0.0
    %806 = vmatpush1.msra.mxu0 0.0
    %807 = vmatprep.subr.mxu0 0.0
    %808 = vmatpush1.msra.mxu0 0.0
    %809 = vmatprep.subr.mxu0 0.0
    %810 = vmatpush1.msra.mxu0 0.0
    %811 = vmatprep.subr.mxu0 0.0
    %812 = vmatpush1.msra.mxu0 0.0
    %813 = vmatprep.subr.mxu0 0.0
    %814 = vmatpush1.msra.mxu0 0.0
    %815 = vmatprep.subr.mxu0 0.0
    %816 = vmatpush1.msra.mxu0 0.0
    %817 = vmatprep.subr.mxu0 0.0
    %818 = vmatpush1.msra.mxu0 0.0
    %819 = vmatprep.subr.mxu0 0.0
    %820 = vmatpush1.msra.mxu0 0.0
    %821 = vmatprep.subr.mxu0 0.0
    %822 = vmatpush1.msra.mxu0 0.0
    %823 = vmatprep.subr.mxu0 0.0
    %824 = vmatpush1.msra.mxu0 0.0
    %825 = vmatprep.subr.mxu0 0.0
    %826 = vmatpush1.msra.mxu0 0.0
    %827 = vmatprep.subr.mxu0 0.0
    %828 = vmatpush1.msra.mxu0 0.0
    %829 = vmatprep.subr.mxu0 0.0
    %830 = vmatpush1.msra.mxu0 0.0
    %831 = vmatprep.subr.mxu0 0.0
    %832 = vmatpush1.msra.mxu0 0.0
    %833 = vmatprep.subr.mxu0 0.0
    %834 = vmatpush1.msra.mxu0 0.0
    %835 = vmatprep.subr.mxu0 0.0
    %836 = vmatpush1.msra.mxu0 0.0
    %837 = vmatprep.subr.mxu0 0.0
    %838 = vmatpush1.msra.mxu0 0.0
    %839 = vmatprep.subr.mxu0 0.0
    %840 = vmatpush1.msra.mxu0 0.0
    %841 = vmatprep.subr.mxu0 0.0
    %842 = vmatpush1.msra.mxu0 0.0
    %843 = vmatprep.subr.mxu0 0.0
    %844 = vmatpush1.msra.mxu0 0.0
    %845 = vmatprep.subr.mxu0 0.0
    %846 = vmatpush1.msra.mxu0 0.0
    %847 = vmatprep.subr.mxu0 0.0
    %848 = vmatpush1.msra.mxu0 0.0
    %849 = vmatprep.mubr.f32.mxu0 0.0
    %850 = vmatmul.mubr.f32.gmra.mrb[0].mxu0 %v780
    %v851 = vpop.f32.mrb[0].mxu0
    %v852 = vadd.f32 %v621, %v851
    %v853 = vpop.f32.mrb[0].mxu0
    %854 = vdwg.mxu0
    %vm855 = vcmp.gt.f32.partialorder %v700, 0.0
    %vm856 = vcmp.gt.f32.partialorder %v776, 0.0
    %vm857 = vcmp.gt.f32.partialorder %v852, 0.0
    %v858 = vmin.f32 %v700, 0.0
    %v859 = vmin.f32 %v776, 0.0
    %v860 = vmin.f32 %v852, 0.0
    %v861 = vmul.f32 %v858, 1.442695
    %v862 = vpow.pop %v861
    %v863 = vmul.f32 %v859, 1.442695
    %v864 = vpow.pop %v863
    %v865 = vmul.f32 %v860, 1.442695
    %v866 = vpow.pop %v865
    %v867 = vsub.f32 %v862, 1.0
    %v868 = vsub.f32 %v864, 1.0
    %v869 = vsub.f32 %v866, 1.0
    %v870 = vsel %vm855, %v700, %v867
    %v871 = vsel %vm856, %v776, %v868
    %v872 = vsel %vm857, %v852, %v869
    %v873 = vld [vmem:[%s8] sm:$0xff]
    %v874 = vld [vmem:[%s8 + $0x8] sm:$0xff]
    %v875 = vld [vmem:[%s8 + $0x10] sm:$0xff]
    %v876 = vld [vmem:[%s8 + $0x18] sm:$0xff]
    %v877 = vld [vmem:[%s8 + $0x20] sm:$0xff]
    %v878 = vld [vmem:[%s8 + $0x28] sm:$0xff]
    %v879 = vld [vmem:[%s8 + $0x30] sm:$0xff]
    %v880 = vld [vmem:[%s8 + $0x38] sm:$0xff]
    %v881 = vld [vmem:[%s8 + $0x40] sm:$0xff]
    %v882 = vld [vmem:[%s8 + $0x48] sm:$0xff]
    %v883 = vld [vmem:[%s8 + $0x50] sm:$0xff]
    %v884 = vld [vmem:[%s8 + $0x58] sm:$0xff]
    %v885 = vld [vmem:[%s9] sm:$0x1]
    %v886 = vld [vmem:[%s9 + $0x1] sm:$0x1]
    %v887 = vld [vmem:[%s9 + $0x2] sm:$0x1]
    %v891 = vlaneseq
    %v892 = vshrl.u32 %v891, 7
    %v893 = vsub.s32 0, %v892
    %v894 = vrot.slane %v885, %v893
    %v895 = vlaneseq
    %v896 = vshrl.u32 %v895, 7
    %v897 = vsub.s32 0, %v896
    %v898 = vrot.slane %v886, %v897
    %v899 = vlaneseq
    %v900 = vshrl.u32 %v899, 7
    %v901 = vsub.s32 0, %v900
    %v902 = vrot.slane %v887, %v901
    %v907 = vsel %vm363, %v870, 0
    %909 = vmatprep.subr.mxu0 0.0
    %910 = vmatpush1.msra.mxu0 %v873
    %911 = vmatprep.subr.mxu0 0.0
    %912 = vmatpush1.msra.mxu0 %v874
    %913 = vmatprep.subr.mxu0 0.0
    %914 = vmatpush1.msra.mxu0 %v875
    %915 = vmatprep.subr.mxu0 0.0
    %916 = vmatpush1.msra.mxu0 %v876
    %917 = vmatprep.subr.mxu0 0.0
    %918 = vmatpush1.msra.mxu0 0.0
    %919 = vmatprep.subr.mxu0 0.0
    %920 = vmatpush1.msra.mxu0 0.0
    %921 = vmatprep.subr.mxu0 0.0
    %922 = vmatpush1.msra.mxu0 0.0
    %923 = vmatprep.subr.mxu0 0.0
    %924 = vmatpush1.msra.mxu0 0.0
    %925 = vmatprep.subr.mxu0 0.0
    %926 = vmatpush1.msra.mxu0 0.0
    %927 = vmatprep.subr.mxu0 0.0
    %928 = vmatpush1.msra.mxu0 0.0
    %929 = vmatprep.subr.mxu0 0.0
    %930 = vmatpush1.msra.mxu0 0.0
    %931 = vmatprep.subr.mxu0 0.0
    %932 = vmatpush1.msra.mxu0 0.0
    %933 = vmatprep.subr.mxu0 0.0
    %934 = vmatpush1.msra.mxu0 0.0
    %935 = vmatprep.subr.mxu0 0.0
    %936 = vmatpush1.msra.mxu0 0.0
    %937 = vmatprep.subr.mxu0 0.0
    %938 = vmatpush1.msra.mxu0 0.0
    %939 = vmatprep.subr.mxu0 0.0
    %940 = vmatpush1.msra.mxu0 0.0
    %941 = vmatprep.subr.mxu0 0.0
    %942 = vmatpush1.msra.mxu0 0.0
    %943 = vmatprep.subr.mxu0 0.0
    %944 = vmatpush1.msra.mxu0 0.0
    %945 = vmatprep.subr.mxu0 0.0
    %946 = vmatpush1.msra.mxu0 0.0
    %947 = vmatprep.subr.mxu0 0.0
    %948 = vmatpush1.msra.mxu0 0.0
    %949 = vmatprep.subr.mxu0 0.0
    %950 = vmatpush1.msra.mxu0 0.0
    %951 = vmatprep.subr.mxu0 0.0
    %952 = vmatpush1.msra.mxu0 0.0
    %953 = vmatprep.subr.mxu0 0.0
    %954 = vmatpush1.msra.mxu0 0.0
    %955 = vmatprep.subr.mxu0 0.0
    %956 = vmatpush1.msra.mxu0 0.0
    %957 = vmatprep.subr.mxu0 0.0
    %958 = vmatpush1.msra.mxu0 0.0
    %959 = vmatprep.subr.mxu0 0.0
    %960 = vmatpush1.msra.mxu0 0.0
    %961 = vmatprep.subr.mxu0 0.0
    %962 = vmatpush1.msra.mxu0 0.0
    %963 = vmatprep.subr.mxu0 0.0
    %964 = vmatpush1.msra.mxu0 0.0
    %965 = vmatprep.subr.mxu0 0.0
    %966 = vmatpush1.msra.mxu0 0.0
    %967 = vmatprep.subr.mxu0 0.0
    %968 = vmatpush1.msra.mxu0 0.0
    %969 = vmatprep.subr.mxu0 0.0
    %970 = vmatpush1.msra.mxu0 0.0
    %971 = vmatprep.subr.mxu0 0.0
    %972 = vmatpush1.msra.mxu0 0.0
    %973 = vmatprep.mubr.f32.mxu0 0.0
    %974 = vmatmul.mubr.f32.gmra.mrb[0].mxu0 %v907
    %v975 = vpop.f32.mrb[0].mxu0
    %v976 = vadd.f32 %v894, %v975
    %v977 = vpop.f32.mrb[0].mxu0
    %978 = vdwg.mxu0
    %v980 = vsel %vm363, %v871, 0
    %982 = vmatprep.subr.mxu0 0.0
    %983 = vmatpush1.msra.mxu0 %v877
    %984 = vmatprep.subr.mxu0 0.0
    %985 = vmatpush1.msra.mxu0 %v878
    %986 = vmatprep.subr.mxu0 0.0
    %987 = vmatpush1.msra.mxu0 %v879
    %988 = vmatprep.subr.mxu0 0.0
    %989 = vmatpush1.msra.mxu0 %v880
    %990 = vmatprep.subr.mxu0 0.0
    %991 = vmatpush1.msra.mxu0 0.0
    %992 = vmatprep.subr.mxu0 0.0
    %993 = vmatpush1.msra.mxu0 0.0
    %994 = vmatprep.subr.mxu0 0.0
    %995 = vmatpush1.msra.mxu0 0.0
    %996 = vmatprep.subr.mxu0 0.0
    %997 = vmatpush1.msra.mxu0 0.0
    %998 = vmatprep.subr.mxu0 0.0
    %999 = vmatpush1.msra.mxu0 0.0
    %1000 = vmatprep.subr.mxu0 0.0
    %1001 = vmatpush1.msra.mxu0 0.0
    %1002 = vmatprep.subr.mxu0 0.0
    %1003 = vmatpush1.msra.mxu0 0.0
    %1004 = vmatprep.subr.mxu0 0.0
    %1005 = vmatpush1.msra.mxu0 0.0
    %1006 = vmatprep.subr.mxu0 0.0
    %1007 = vmatpush1.msra.mxu0 0.0
    %1008 = vmatprep.subr.mxu0 0.0
    %1009 = vmatpush1.msra.mxu0 0.0
    %1010 = vmatprep.subr.mxu0 0.0
    %1011 = vmatpush1.msra.mxu0 0.0
    %1012 = vmatprep.subr.mxu0 0.0
    %1013 = vmatpush1.msra.mxu0 0.0
    %1014 = vmatprep.subr.mxu0 0.0
    %1015 = vmatpush1.msra.mxu0 0.0
    %1016 = vmatprep.subr.mxu0 0.0
    %1017 = vmatpush1.msra.mxu0 0.0
    %1018 = vmatprep.subr.mxu0 0.0
    %1019 = vmatpush1.msra.mxu0 0.0
    %1020 = vmatprep.subr.mxu0 0.0
    %1021 = vmatpush1.msra.mxu0 0.0
    %1022 = vmatprep.subr.mxu0 0.0
    %1023 = vmatpush1.msra.mxu0 0.0
    %1024 = vmatprep.subr.mxu0 0.0
    %1025 = vmatpush1.msra.mxu0 0.0
    %1026 = vmatprep.subr.mxu0 0.0
    %1027 = vmatpush1.msra.mxu0 0.0
    %1028 = vmatprep.subr.mxu0 0.0
    %1029 = vmatpush1.msra.mxu0 0.0
    %1030 = vmatprep.subr.mxu0 0.0
    %1031 = vmatpush1.msra.mxu0 0.0
    %1032 = vmatprep.subr.mxu0 0.0
    %1033 = vmatpush1.msra.mxu0 0.0
    %1034 = vmatprep.subr.mxu0 0.0
    %1035 = vmatpush1.msra.mxu0 0.0
    %1036 = vmatprep.subr.mxu0 0.0
    %1037 = vmatpush1.msra.mxu0 0.0
    %1038 = vmatprep.subr.mxu0 0.0
    %1039 = vmatpush1.msra.mxu0 0.0
    %1040 = vmatprep.subr.mxu0 0.0
    %1041 = vmatpush1.msra.mxu0 0.0
    %1042 = vmatprep.subr.mxu0 0.0
    %1043 = vmatpush1.msra.mxu0 0.0
    %1044 = vmatprep.subr.mxu0 0.0
    %1045 = vmatpush1.msra.mxu0 0.0
    %1046 = vmatprep.mubr.f32.mxu0 0.0
    %1047 = vmatmul.mubr.f32.gmra.mrb[0].mxu0 %v980
    %v1048 = vpop.f32.mrb[0].mxu0
    %v1049 = vadd.f32 %v898, %v1048
    %v1050 = vpop.f32.mrb[0].mxu0
    %1051 = vdwg.mxu0
    %v1053 = vsel %vm363, %v872, 0
    %1055 = vmatprep.subr.mxu0 0.0
    %1056 = vmatpush1.msra.mxu0 %v881
    %1057 = vmatprep.subr.mxu0 0.0
    %1058 = vmatpush1.msra.mxu0 %v882
    %1059 = vmatprep.subr.mxu0 0.0
    %1060 = vmatpush1.msra.mxu0 %v883
    %1061 = vmatprep.subr.mxu0 0.0
    %1062 = vmatpush1.msra.mxu0 %v884
    %1063 = vmatprep.subr.mxu0 0.0
    %1064 = vmatpush1.msra.mxu0 0.0
    %1065 = vmatprep.subr.mxu0 0.0
    %1066 = vmatpush1.msra.mxu0 0.0
    %1067 = vmatprep.subr.mxu0 0.0
    %1068 = vmatpush1.msra.mxu0 0.0
    %1069 = vmatprep.subr.mxu0 0.0
    %1070 = vmatpush1.msra.mxu0 0.0
    %1071 = vmatprep.subr.mxu0 0.0
    %1072 = vmatpush1.msra.mxu0 0.0
    %1073 = vmatprep.subr.mxu0 0.0
    %1074 = vmatpush1.msra.mxu0 0.0
    %1075 = vmatprep.subr.mxu0 0.0
    %1076 = vmatpush1.msra.mxu0 0.0
    %1077 = vmatprep.subr.mxu0 0.0
    %1078 = vmatpush1.msra.mxu0 0.0
    %1079 = vmatprep.subr.mxu0 0.0
    %1080 = vmatpush1.msra.mxu0 0.0
    %1081 = vmatprep.subr.mxu0 0.0
    %1082 = vmatpush1.msra.mxu0 0.0
    %1083 = vmatprep.subr.mxu0 0.0
    %1084 = vmatpush1.msra.mxu0 0.0
    %1085 = vmatprep.subr.mxu0 0.0
    %1086 = vmatpush1.msra.mxu0 0.0
    %1087 = vmatprep.subr.mxu0 0.0
    %1088 = vmatpush1.msra.mxu0 0.0
    %1089 = vmatprep.subr.mxu0 0.0
    %1090 = vmatpush1.msra.mxu0 0.0
    %1091 = vmatprep.subr.mxu0 0.0
    %1092 = vmatpush1.msra.mxu0 0.0
    %1093 = vmatprep.subr.mxu0 0.0
    %1094 = vmatpush1.msra.mxu0 0.0
    %1095 = vmatprep.subr.mxu0 0.0
    %1096 = vmatpush1.msra.mxu0 0.0
    %1097 = vmatprep.subr.mxu0 0.0
    %1098 = vmatpush1.msra.mxu0 0.0
    %1099 = vmatprep.subr.mxu0 0.0
    %1100 = vmatpush1.msra.mxu0 0.0
    %1101 = vmatprep.subr.mxu0 0.0
    %1102 = vmatpush1.msra.mxu0 0.0
    %1103 = vmatprep.subr.mxu0 0.0
    %1104 = vmatpush1.msra.mxu0 0.0
    %1105 = vmatprep.subr.mxu0 0.0
    %1106 = vmatpush1.msra.mxu0 0.0
    %1107 = vmatprep.subr.mxu0 0.0
    %1108 = vmatpush1.msra.mxu0 0.0
    %1109 = vmatprep.subr.mxu0 0.0
    %1110 = vmatpush1.msra.mxu0 0.0
    %1111 = vmatprep.subr.mxu0 0.0
    %1112 = vmatpush1.msra.mxu0 0.0
    %1113 = vmatprep.subr.mxu0 0.0
    %1114 = vmatpush1.msra.mxu0 0.0
    %1115 = vmatprep.subr.mxu0 0.0
    %1116 = vmatpush1.msra.mxu0 0.0
    %1117 = vmatprep.subr.mxu0 0.0
    %1118 = vmatpush1.msra.mxu0 0.0
    %1119 = vmatprep.mubr.f32.mxu0 0.0
    %1120 = vmatmul.mubr.f32.gmra.mrb[0].mxu0 %v1053
    %v1121 = vpop.f32.mrb[0].mxu0
    %v1122 = vadd.f32 %v902, %v1121
    %v1123 = vpop.f32.mrb[0].mxu0
    %1124 = vdwg.mxu0
    %v1125 = vld [vmem:[%s10] sm:$0xf]
    %v1127 = vsel %vm625, %v976, 0
    %v1130 = vsel %vm629, %v1125, 0
    %1132 = vmatprep.subr.mxu0 0.0
    %1133 = vmatpush1.msra.mxu0 %v1130
    %1134 = vmatprep.subr.mxu0 0.0
    %1135 = vmatpush1.msra.mxu0 0.0
    %1136 = vmatprep.subr.mxu0 0.0
    %1137 = vmatpush1.msra.mxu0 0.0
    %1138 = vmatprep.subr.mxu0 0.0
    %1139 = vmatpush1.msra.mxu0 0.0
    %1140 = vmatprep.subr.mxu0 0.0
    %1141 = vmatpush1.msra.mxu0 0.0
    %1142 = vmatprep.subr.mxu0 0.0
    %1143 = vmatpush1.msra.mxu0 0.0
    %1144 = vmatprep.subr.mxu0 0.0
    %1145 = vmatpush1.msra.mxu0 0.0
    %1146 = vmatprep.subr.mxu0 0.0
    %1147 = vmatpush1.msra.mxu0 0.0
    %1148 = vmatprep.subr.mxu0 0.0
    %1149 = vmatpush1.msra.mxu0 0.0
    %1150 = vmatprep.subr.mxu0 0.0
    %1151 = vmatpush1.msra.mxu0 0.0
    %1152 = vmatprep.subr.mxu0 0.0
    %1153 = vmatpush1.msra.mxu0 0.0
    %1154 = vmatprep.subr.mxu0 0.0
    %1155 = vmatpush1.msra.mxu0 0.0
    %1156 = vmatprep.subr.mxu0 0.0
    %1157 = vmatpush1.msra.mxu0 0.0
    %1158 = vmatprep.subr.mxu0 0.0
    %1159 = vmatpush1.msra.mxu0 0.0
    %1160 = vmatprep.subr.mxu0 0.0
    %1161 = vmatpush1.msra.mxu0 0.0
    %1162 = vmatprep.subr.mxu0 0.0
    %1163 = vmatpush1.msra.mxu0 0.0
    %1164 = vmatprep.subr.mxu0 0.0
    %1165 = vmatpush1.msra.mxu0 0.0
    %1166 = vmatprep.subr.mxu0 0.0
    %1167 = vmatpush1.msra.mxu0 0.0
    %1168 = vmatprep.subr.mxu0 0.0
    %1169 = vmatpush1.msra.mxu0 0.0
    %1170 = vmatprep.subr.mxu0 0.0
    %1171 = vmatpush1.msra.mxu0 0.0
    %1172 = vmatprep.subr.mxu0 0.0
    %1173 = vmatpush1.msra.mxu0 0.0
    %1174 = vmatprep.subr.mxu0 0.0
    %1175 = vmatpush1.msra.mxu0 0.0
    %1176 = vmatprep.subr.mxu0 0.0
    %1177 = vmatpush1.msra.mxu0 0.0
    %1178 = vmatprep.subr.mxu0 0.0
    %1179 = vmatpush1.msra.mxu0 0.0
    %1180 = vmatprep.subr.mxu0 0.0
    %1181 = vmatpush1.msra.mxu0 0.0
    %1182 = vmatprep.subr.mxu0 0.0
    %1183 = vmatpush1.msra.mxu0 0.0
    %1184 = vmatprep.subr.mxu0 0.0
    %1185 = vmatpush1.msra.mxu0 0.0
    %1186 = vmatprep.subr.mxu0 0.0
    %1187 = vmatpush1.msra.mxu0 0.0
    %1188 = vmatprep.subr.mxu0 0.0
    %1189 = vmatpush1.msra.mxu0 0.0
    %1190 = vmatprep.subr.mxu0 0.0
    %1191 = vmatpush1.msra.mxu0 0.0
    %1192 = vmatprep.subr.mxu0 0.0
    %1193 = vmatpush1.msra.mxu0 0.0
    %1194 = vmatprep.subr.mxu0 0.0
    %1195 = vmatpush1.msra.mxu0 0.0
    %1196 = vmatprep.mubr.f32.mxu0 0.0
    %1197 = vmatmul.mubr.f32.gmra.mrb[0].mxu0 %v1127
    %v1198 = vpop.f32.mrb[0].mxu0
    %v1199 = vadd.f32 0.0, %v1198
    %v1200 = vpop.f32.mrb[0].mxu0
    %1201 = vdwg.mxu0
    %v1202 = vld [vmem:[%s14] sm:$0xff]
    %v1203 = vld [vmem:[%s14 + $0x8] sm:$0xff]
    %v1204 = vld [vmem:[%s14 + $0x10] sm:$0xff]
    %v1205 = vld [vmem:[%s14 + $0x18] sm:$0xff]
    %v1206 = vld [vmem:[%s11] sm:$0xf]
    %v1208 = vsel %vm625, %v1049, 0
    %v1211 = vsel %vm629, %v1206, 0
    %1213 = vmatprep.subr.mxu0 0.0
    %1214 = vmatpush1.msra.mxu0 %v1211
    %1215 = vmatprep.subr.mxu0 0.0
    %1216 = vmatpush1.msra.mxu0 0.0
    %1217 = vmatprep.subr.mxu0 0.0
    %1218 = vmatpush1.msra.mxu0 0.0
    %1219 = vmatprep.subr.mxu0 0.0
    %1220 = vmatpush1.msra.mxu0 0.0
    %1221 = vmatprep.subr.mxu0 0.0
    %1222 = vmatpush1.msra.mxu0 0.0
    %1223 = vmatprep.subr.mxu0 0.0
    %1224 = vmatpush1.msra.mxu0 0.0
    %1225 = vmatprep.subr.mxu0 0.0
    %1226 = vmatpush1.msra.mxu0 0.0
    %1227 = vmatprep.subr.mxu0 0.0
    %1228 = vmatpush1.msra.mxu0 0.0
    %1229 = vmatprep.subr.mxu0 0.0
    %1230 = vmatpush1.msra.mxu0 0.0
    %1231 = vmatprep.subr.mxu0 0.0
    %1232 = vmatpush1.msra.mxu0 0.0
    %1233 = vmatprep.subr.mxu0 0.0
    %1234 = vmatpush1.msra.mxu0 0.0
    %1235 = vmatprep.subr.mxu0 0.0
    %1236 = vmatpush1.msra.mxu0 0.0
    %1237 = vmatprep.subr.mxu0 0.0
    %1238 = vmatpush1.msra.mxu0 0.0
    %1239 = vmatprep.subr.mxu0 0.0
    %1240 = vmatpush1.msra.mxu0 0.0
    %1241 = vmatprep.subr.mxu0 0.0
    %1242 = vmatpush1.msra.mxu0 0.0
    %1243 = vmatprep.subr.mxu0 0.0
    %1244 = vmatpush1.msra.mxu0 0.0
    %1245 = vmatprep.subr.mxu0 0.0
    %1246 = vmatpush1.msra.mxu0 0.0
    %1247 = vmatprep.subr.mxu0 0.0
    %1248 = vmatpush1.msra.mxu0 0.0
    %1249 = vmatprep.subr.mxu0 0.0
    %1250 = vmatpush1.msra.mxu0 0.0
    %1251 = vmatprep.subr.mxu0 0.0
    %1252 = vmatpush1.msra.mxu0 0.0
    %1253 = vmatprep.subr.mxu0 0.0
    %1254 = vmatpush1.msra.mxu0 0.0
    %1255 = vmatprep.subr.mxu0 0.0
    %1256 = vmatpush1.msra.mxu0 0.0
    %1257 = vmatprep.subr.mxu0 0.0
    %1258 = vmatpush1.msra.mxu0 0.0
    %1259 = vmatprep.subr.mxu0 0.0
    %1260 = vmatpush1.msra.mxu0 0.0
    %1261 = vmatprep.subr.mxu0 0.0
    %1262 = vmatpush1.msra.mxu0 0.0
    %1263 = vmatprep.subr.mxu0 0.0
    %1264 = vmatpush1.msra.mxu0 0.0
    %1265 = vmatprep.subr.mxu0 0.0
    %1266 = vmatpush1.msra.mxu0 0.0
    %1267 = vmatprep.subr.mxu0 0.0
    %1268 = vmatpush1.msra.mxu0 0.0
    %1269 = vmatprep.subr.mxu0 0.0
    %1270 = vmatpush1.msra.mxu0 0.0
    %1271 = vmatprep.subr.mxu0 0.0
    %1272 = vmatpush1.msra.mxu0 0.0
    %1273 = vmatprep.subr.mxu0 0.0
    %1274 = vmatpush1.msra.mxu0 0.0
    %1275 = vmatprep.subr.mxu0 0.0
    %1276 = vmatpush1.msra.mxu0 0.0
    %1277 = vmatprep.mubr.f32.mxu0 0.0
    %1278 = vmatmul.mubr.f32.gmra.mrb[0].mxu0 %v1208
    %v1279 = vpop.f32.mrb[0].mxu0
    %v1280 = vadd.f32 0.0, %v1279
    %v1281 = vpop.f32.mrb[0].mxu0
    %1282 = vdwg.mxu0
    %vm1283 = vcmask 64512
    %v1285 = vsel %vm1283, %v1202, 0
    %v1288 = vsel %vm1283, %v1203, 0
    %v1291 = vsel %vm1283, %v1204, 0
    %v1294 = vsel %vm1283, %v1205, 0
    %1296 = vmatprep.subr.mxu0 0.0
    %1297 = vmatpush1.msra.mxu0 %v1280
    %1298 = vmatprep.subr.mxu0 0.0
    %1299 = vmatpush1.msra.mxu0 0.0
    %1300 = vmatprep.subr.mxu0 0.0
    %1301 = vmatpush1.msra.mxu0 0.0
    %1302 = vmatprep.subr.mxu0 0.0
    %1303 = vmatpush1.msra.mxu0 0.0
    %1304 = vmatprep.subr.mxu0 0.0
    %1305 = vmatpush1.msra.mxu0 0.0
    %1306 = vmatprep.subr.mxu0 0.0
    %1307 = vmatpush1.msra.mxu0 0.0
    %1308 = vmatprep.subr.mxu0 0.0
    %1309 = vmatpush1.msra.mxu0 0.0
    %1310 = vmatprep.subr.mxu0 0.0
    %1311 = vmatpush1.msra.mxu0 0.0
    %1312 = vmatprep.subr.mxu0 0.0
    %1313 = vmatpush1.msra.mxu0 0.0
    %1314 = vmatprep.subr.mxu0 0.0
    %1315 = vmatpush1.msra.mxu0 0.0
    %1316 = vmatprep.subr.mxu0 0.0
    %1317 = vmatpush1.msra.mxu0 0.0
    %1318 = vmatprep.subr.mxu0 0.0
    %1319 = vmatpush1.msra.mxu0 0.0
    %1320 = vmatprep.subr.mxu0 0.0
    %1321 = vmatpush1.msra.mxu0 0.0
    %1322 = vmatprep.subr.mxu0 0.0
    %1323 = vmatpush1.msra.mxu0 0.0
    %1324 = vmatprep.subr.mxu0 0.0
    %1325 = vmatpush1.msra.mxu0 0.0
    %1326 = vmatprep.subr.mxu0 0.0
    %1327 = vmatpush1.msra.mxu0 0.0
    %1328 = vmatprep.subr.mxu0 0.0
    %1329 = vmatpush1.msra.mxu0 0.0
    %1330 = vmatprep.subr.mxu0 0.0
    %1331 = vmatpush1.msra.mxu0 0.0
    %1332 = vmatprep.subr.mxu0 0.0
    %1333 = vmatpush1.msra.mxu0 0.0
    %1334 = vmatprep.subr.mxu0 0.0
    %1335 = vmatpush1.msra.mxu0 0.0
    %1336 = vmatprep.subr.mxu0 0.0
    %1337 = vmatpush1.msra.mxu0 0.0
    %1338 = vmatprep.subr.mxu0 0.0
    %1339 = vmatpush1.msra.mxu0 0.0
    %1340 = vmatprep.subr.mxu0 0.0
    %1341 = vmatpush1.msra.mxu0 0.0
    %1342 = vmatprep.subr.mxu0 0.0
    %1343 = vmatpush1.msra.mxu0 0.0
    %1344 = vmatprep.subr.mxu0 0.0
    %1345 = vmatpush1.msra.mxu0 0.0
    %1346 = vmatprep.subr.mxu0 0.0
    %1347 = vmatpush1.msra.mxu0 0.0
    %1348 = vmatprep.subr.mxu0 0.0
    %1349 = vmatpush1.msra.mxu0 0.0
    %1350 = vmatprep.subr.mxu0 0.0
    %1351 = vmatpush1.msra.mxu0 0.0
    %1352 = vmatprep.subr.mxu0 0.0
    %1353 = vmatpush1.msra.mxu0 0.0
    %1354 = vmatprep.subr.mxu0 0.0
    %1355 = vmatpush1.msra.mxu0 0.0
    %1356 = vmatprep.subr.mxu0 0.0
    %1357 = vmatpush1.msra.mxu0 0.0
    %1358 = vmatprep.subr.mxu0 0.0
    %1359 = vmatpush1.msra.mxu0 0.0
    %1360 = vmatprep.mubr.f32.mxu0 0.0
    %1361 = vmatmul.mubr.f32.gmra.mrb[0].mxu0 %v1285
    %v1362 = vpop.f32.mrb[0].mxu0
    %v1363 = vadd.f32 0.0, %v1362
    %v1364 = vpop.f32.mrb[0].mxu0
    %1365 = vmatprep.mubr.f32.mxu0 0.0
    %1366 = vmatmul.mubr.f32.gmra.mrb[0].mxu0 %v1288
    %v1367 = vpop.f32.mrb[0].mxu0
    %v1368 = vadd.f32 0.0, %v1367
    %v1369 = vpop.f32.mrb[0].mxu0
    %1370 = vmatprep.mubr.f32.mxu0 0.0
    %1371 = vmatmul.mubr.f32.gmra.mrb[0].mxu0 %v1291
    %v1372 = vpop.f32.mrb[0].mxu0
    %v1373 = vadd.f32 0.0, %v1372
    %v1374 = vpop.f32.mrb[0].mxu0
    %1375 = vmatprep.mubr.f32.mxu0 0.0
    %1376 = vmatmul.mubr.f32.gmra.mrb[0].mxu0 %v1294
    %v1377 = vpop.f32.mrb[0].mxu0
    %v1378 = vadd.f32 0.0, %v1377
    %v1379 = vpop.f32.mrb[0].mxu0
    %1380 = vdwg.mxu0
    %v1381 = vld [vmem:[%s15] sm:$0xff]
    %v1382 = vld [vmem:[%s15 + $0x8] sm:$0xff]
    %v1383 = vld [vmem:[%s15 + $0x10] sm:$0xff]
    %v1384 = vld [vmem:[%s15 + $0x18] sm:$0xff]
    %v1385 = vld [vmem:[%s12] sm:$0xf]
    %v1387 = vsel %vm625, %v1122, 0
    %v1390 = vsel %vm629, %v1385, 0
    %1392 = vmatprep.subr.mxu0 0.0
    %1393 = vmatpush1.msra.mxu0 %v1390
    %1394 = vmatprep.subr.mxu0 0.0
    %1395 = vmatpush1.msra.mxu0 0.0
    %1396 = vmatprep.subr.mxu0 0.0
    %1397 = vmatpush1.msra.mxu0 0.0
    %1398 = vmatprep.subr.mxu0 0.0
    %1399 = vmatpush1.msra.mxu0 0.0
    %1400 = vmatprep.subr.mxu0 0.0
    %1401 = vmatpush1.msra.mxu0 0.0
    %1402 = vmatprep.subr.mxu0 0.0
    %1403 = vmatpush1.msra.mxu0 0.0
    %1404 = vmatprep.subr.mxu0 0.0
    %1405 = vmatpush1.msra.mxu0 0.0
    %1406 = vmatprep.subr.mxu0 0.0
    %1407 = vmatpush1.msra.mxu0 0.0
    %1408 = vmatprep.subr.mxu0 0.0
    %1409 = vmatpush1.msra.mxu0 0.0
    %1410 = vmatprep.subr.mxu0 0.0
    %1411 = vmatpush1.msra.mxu0 0.0
    %1412 = vmatprep.subr.mxu0 0.0
    %1413 = vmatpush1.msra.mxu0 0.0
    %1414 = vmatprep.subr.mxu0 0.0
    %1415 = vmatpush1.msra.mxu0 0.0
    %1416 = vmatprep.subr.mxu0 0.0
    %1417 = vmatpush1.msra.mxu0 0.0
    %1418 = vmatprep.subr.mxu0 0.0
    %1419 = vmatpush1.msra.mxu0 0.0
    %1420 = vmatprep.subr.mxu0 0.0
    %1421 = vmatpush1.msra.mxu0 0.0
    %1422 = vmatprep.subr.mxu0 0.0
    %1423 = vmatpush1.msra.mxu0 0.0
    %1424 = vmatprep.subr.mxu0 0.0
    %1425 = vmatpush1.msra.mxu0 0.0
    %1426 = vmatprep.subr.mxu0 0.0
    %1427 = vmatpush1.msra.mxu0 0.0
    %1428 = vmatprep.subr.mxu0 0.0
    %1429 = vmatpush1.msra.mxu0 0.0
    %1430 = vmatprep.subr.mxu0 0.0
    %1431 = vmatpush1.msra.mxu0 0.0
    %1432 = vmatprep.subr.mxu0 0.0
    %1433 = vmatpush1.msra.mxu0 0.0
    %1434 = vmatprep.subr.mxu0 0.0
    %1435 = vmatpush1.msra.mxu0 0.0
    %1436 = vmatprep.subr.mxu0 0.0
    %1437 = vmatpush1.msra.mxu0 0.0
    %1438 = vmatprep.subr.mxu0 0.0
    %1439 = vmatpush1.msra.mxu0 0.0
    %1440 = vmatprep.subr.mxu0 0.0
    %1441 = vmatpush1.msra.mxu0 0.0
    %1442 = vmatprep.subr.mxu0 0.0
    %1443 = vmatpush1.msra.mxu0 0.0
    %1444 = vmatprep.subr.mxu0 0.0
    %1445 = vmatpush1.msra.mxu0 0.0
    %1446 = vmatprep.subr.mxu0 0.0
    %1447 = vmatpush1.msra.mxu0 0.0
    %1448 = vmatprep.subr.mxu0 0.0
    %1449 = vmatpush1.msra.mxu0 0.0
    %1450 = vmatprep.subr.mxu0 0.0
    %1451 = vmatpush1.msra.mxu0 0.0
    %1452 = vmatprep.subr.mxu0 0.0
    %1453 = vmatpush1.msra.mxu0 0.0
    %1454 = vmatprep.subr.mxu0 0.0
    %1455 = vmatpush1.msra.mxu0 0.0
    %1456 = vmatprep.mubr.f32.mxu0 0.0
    %1457 = vmatmul.mubr.f32.gmra.mrb[0].mxu0 %v1387
    %v1458 = vpop.f32.mrb[0].mxu0
    %v1459 = vadd.f32 0.0, %v1458
    %v1460 = vpop.f32.mrb[0].mxu0
    %1461 = vdwg.mxu0
    %v1463 = vsel %vm1283, %v1381, 0
    %v1466 = vsel %vm1283, %v1382, 0
    %v1469 = vsel %vm1283, %v1383, 0
    %v1472 = vsel %vm1283, %v1384, 0
    %1474 = vmatprep.subr.mxu0 0.0
    %1475 = vmatpush1.msra.mxu0 %v1459
    %1476 = vmatprep.subr.mxu0 0.0
    %1477 = vmatpush1.msra.mxu0 0.0
    %1478 = vmatprep.subr.mxu0 0.0
    %1479 = vmatpush1.msra.mxu0 0.0
    %1480 = vmatprep.subr.mxu0 0.0
    %1481 = vmatpush1.msra.mxu0 0.0
    %1482 = vmatprep.subr.mxu0 0.0
    %1483 = vmatpush1.msra.mxu0 0.0
    %1484 = vmatprep.subr.mxu0 0.0
    %1485 = vmatpush1.msra.mxu0 0.0
    %1486 = vmatprep.subr.mxu0 0.0
    %1487 = vmatpush1.msra.mxu0 0.0
    %1488 = vmatprep.subr.mxu0 0.0
    %1489 = vmatpush1.msra.mxu0 0.0
    %1490 = vmatprep.subr.mxu0 0.0
    %1491 = vmatpush1.msra.mxu0 0.0
    %1492 = vmatprep.subr.mxu0 0.0
    %1493 = vmatpush1.msra.mxu0 0.0
    %1494 = vmatprep.subr.mxu0 0.0
    %1495 = vmatpush1.msra.mxu0 0.0
    %1496 = vmatprep.subr.mxu0 0.0
    %1497 = vmatpush1.msra.mxu0 0.0
    %1498 = vmatprep.subr.mxu0 0.0
    %1499 = vmatpush1.msra.mxu0 0.0
    %1500 = vmatprep.subr.mxu0 0.0
    %1501 = vmatpush1.msra.mxu0 0.0
    %1502 = vmatprep.subr.mxu0 0.0
    %1503 = vmatpush1.msra.mxu0 0.0
    %1504 = vmatprep.subr.mxu0 0.0
    %1505 = vmatpush1.msra.mxu0 0.0
    %1506 = vmatprep.subr.mxu0 0.0
    %1507 = vmatpush1.msra.mxu0 0.0
    %1508 = vmatprep.subr.mxu0 0.0
    %1509 = vmatpush1.msra.mxu0 0.0
    %1510 = vmatprep.subr.mxu0 0.0
    %1511 = vmatpush1.msra.mxu0 0.0
    %1512 = vmatprep.subr.mxu0 0.0
    %1513 = vmatpush1.msra.mxu0 0.0
    %1514 = vmatprep.subr.mxu0 0.0
    %1515 = vmatpush1.msra.mxu0 0.0
    %1516 = vmatprep.subr.mxu0 0.0
    %1517 = vmatpush1.msra.mxu0 0.0
    %1518 = vmatprep.subr.mxu0 0.0
    %1519 = vmatpush1.msra.mxu0 0.0
    %1520 = vmatprep.subr.mxu0 0.0
    %1521 = vmatpush1.msra.mxu0 0.0
    %1522 = vmatprep.subr.mxu0 0.0
    %1523 = vmatpush1.msra.mxu0 0.0
    %1524 = vmatprep.subr.mxu0 0.0
    %1525 = vmatpush1.msra.mxu0 0.0
    %1526 = vmatprep.subr.mxu0 0.0
    %1527 = vmatpush1.msra.mxu0 0.0
    %1528 = vmatprep.subr.mxu0 0.0
    %1529 = vmatpush1.msra.mxu0 0.0
    %1530 = vmatprep.subr.mxu0 0.0
    %1531 = vmatpush1.msra.mxu0 0.0
    %1532 = vmatprep.subr.mxu0 0.0
    %1533 = vmatpush1.msra.mxu0 0.0
    %1534 = vmatprep.subr.mxu0 0.0
    %1535 = vmatpush1.msra.mxu0 0.0
    %1536 = vmatprep.subr.mxu0 0.0
    %1537 = vmatpush1.msra.mxu0 0.0
    %1538 = vmatprep.mubr.f32.mxu0 0.0
    %1539 = vmatmul.mubr.f32.gmra.mrb[0].mxu0 %v1463
    %v1540 = vpop.f32.mrb[0].mxu0
    %v1541 = vadd.f32 0.0, %v1540
    %v1542 = vpop.f32.mrb[0].mxu0
    %1543 = vmatprep.mubr.f32.mxu0 0.0
    %1544 = vmatmul.mubr.f32.gmra.mrb[0].mxu0 %v1466
    %v1545 = vpop.f32.mrb[0].mxu0
    %v1546 = vadd.f32 0.0, %v1545
    %v1547 = vpop.f32.mrb[0].mxu0
    %1548 = vmatprep.mubr.f32.mxu0 0.0
    %1549 = vmatmul.mubr.f32.gmra.mrb[0].mxu0 %v1469
    %v1550 = vpop.f32.mrb[0].mxu0
    %v1551 = vadd.f32 0.0, %v1550
    %v1552 = vpop.f32.mrb[0].mxu0
    %1553 = vmatprep.mubr.f32.mxu0 0.0
    %1554 = vmatmul.mubr.f32.gmra.mrb[0].mxu0 %v1472
    %v1555 = vpop.f32.mrb[0].mxu0
    %v1556 = vadd.f32 0.0, %v1555
    %v1557 = vpop.f32.mrb[0].mxu0
    %1558 = vdwg.mxu0
    %v1559 = vmul.f32 %v1363, %v1541
    %v1560 = vmul.f32 %v1368, %v1546
    %v1561 = vmul.f32 %v1373, %v1551
    %v1562 = vmul.f32 %v1378, %v1556
    %v1563 = vld [vmem:[%s13] sm:$0xff]
    %v1565 = vsel %vm1283, %v1559, 0
    %v1568 = vsel %vm1283, %v1560, 0
    %v1571 = vsel %vm1283, %v1561, 0
    %v1574 = vsel %vm1283, %v1562, 0
    %1576 = vmatprep.subr.mxu0 0.0
    %1577 = vmatpush1.msra.mxu0 %v1563
    %1578 = vmatprep.subr.mxu0 0.0
    %1579 = vmatpush1.msra.mxu0 0.0
    %1580 = vmatprep.subr.mxu0 0.0
    %1581 = vmatpush1.msra.mxu0 0.0
    %1582 = vmatprep.subr.mxu0 0.0
    %1583 = vmatpush1.msra.mxu0 0.0
    %1584 = vmatprep.subr.mxu0 0.0
    %1585 = vmatpush1.msra.mxu0 0.0
    %1586 = vmatprep.subr.mxu0 0.0
    %1587 = vmatpush1.msra.mxu0 0.0
    %1588 = vmatprep.subr.mxu0 0.0
    %1589 = vmatpush1.msra.mxu0 0.0
    %1590 = vmatprep.subr.mxu0 0.0
    %1591 = vmatpush1.msra.mxu0 0.0
    %1592 = vmatprep.subr.mxu0 0.0
    %1593 = vmatpush1.msra.mxu0 0.0
    %1594 = vmatprep.subr.mxu0 0.0
    %1595 = vmatpush1.msra.mxu0 0.0
    %1596 = vmatprep.subr.mxu0 0.0
    %1597 = vmatpush1.msra.mxu0 0.0
    %1598 = vmatprep.subr.mxu0 0.0
    %1599 = vmatpush1.msra.mxu0 0.0
    %1600 = vmatprep.subr.mxu0 0.0
    %1601 = vmatpush1.msra.mxu0 0.0
    %1602 = vmatprep.subr.mxu0 0.0
    %1603 = vmatpush1.msra.mxu0 0.0
    %1604 = vmatprep.subr.mxu0 0.0
    %1605 = vmatpush1.msra.mxu0 0.0
    %1606 = vmatprep.subr.mxu0 0.0
    %1607 = vmatpush1.msra.mxu0 0.0
    %1608 = vmatprep.subr.mxu0 0.0
    %1609 = vmatpush1.msra.mxu0 0.0
    %1610 = vmatprep.subr.mxu0 0.0
    %1611 = vmatpush1.msra.mxu0 0.0
    %1612 = vmatprep.subr.mxu0 0.0
    %1613 = vmatpush1.msra.mxu0 0.0
    %1614 = vmatprep.subr.mxu0 0.0
    %1615 = vmatpush1.msra.mxu0 0.0
    %1616 = vmatprep.subr.mxu0 0.0
    %1617 = vmatpush1.msra.mxu0 0.0
    %1618 = vmatprep.subr.mxu0 0.0
    %1619 = vmatpush1.msra.mxu0 0.0
    %1620 = vmatprep.subr.mxu0 0.0
    %1621 = vmatpush1.msra.mxu0 0.0
    %1622 = vmatprep.subr.mxu0 0.0
    %1623 = vmatpush1.msra.mxu0 0.0
    %1624 = vmatprep.subr.mxu0 0.0
    %1625 = vmatpush1.msra.mxu0 0.0
    %1626 = vmatprep.subr.mxu0 0.0
    %1627 = vmatpush1.msra.mxu0 0.0
    %1628 = vmatprep.subr.mxu0 0.0
    %1629 = vmatpush1.msra.mxu0 0.0
    %1630 = vmatprep.subr.mxu0 0.0
    %1631 = vmatpush1.msra.mxu0 0.0
    %1632 = vmatprep.subr.mxu0 0.0
    %1633 = vmatpush1.msra.mxu0 0.0
    %1634 = vmatprep.subr.mxu0 0.0
    %1635 = vmatpush1.msra.mxu0 0.0
    %1636 = vmatprep.subr.mxu0 0.0
    %1637 = vmatpush1.msra.mxu0 0.0
    %1638 = vmatprep.subr.mxu0 0.0
    %1639 = vmatpush1.msra.mxu0 0.0
    %1640 = vmatprep.mubr.f32.mxu0 0.0
    %1641 = vmatmul.mubr.f32.gmra.mrb[0].mxu0 %v1565
    %v1642 = vpop.f32.mrb[0].mxu0
    %v1643 = vadd.f32 0.0, %v1642
    %v1644 = vpop.f32.mrb[0].mxu0
    %1645 = vmatprep.mubr.f32.mxu0 0.0
    %1646 = vmatmul.mubr.f32.gmra.mrb[0].mxu0 %v1568
    %v1647 = vpop.f32.mrb[0].mxu0
    %v1648 = vadd.f32 0.0, %v1647
    %v1649 = vpop.f32.mrb[0].mxu0
    %1650 = vmatprep.mubr.f32.mxu0 0.0
    %1651 = vmatmul.mubr.f32.gmra.mrb[0].mxu0 %v1571
    %v1652 = vpop.f32.mrb[0].mxu0
    %v1653 = vadd.f32 0.0, %v1652
    %v1654 = vpop.f32.mrb[0].mxu0
    %1655 = vmatprep.mubr.f32.mxu0 0.0
    %1656 = vmatmul.mubr.f32.gmra.mrb[0].mxu0 %v1574
    %v1657 = vpop.f32.mrb[0].mxu0
    %v1658 = vadd.f32 0.0, %v1657
    %v1659 = vpop.f32.mrb[0].mxu0
    %1660 = vdwg.mxu0
    %v1662 = vsel %vm625, %v1199, 0
    %v1665 = vsel %vm625, %v1643, 0
    %v1668 = vsel %vm625, %v1648, 0
    %v1671 = vsel %vm625, %v1653, 0
    %v1674 = vsel %vm625, %v1658, 0
    %1676 = vmatprep.subr.mxu0 0.0
    %1677 = vmatpush1.xpose.msra.mxu0 %v1665
    %1678 = vmatprep.subr.mxu0 0.0
    %1679 = vmatpush1.xpose.msra.mxu0 %v1668
    %1680 = vmatprep.subr.mxu0 0.0
    %1681 = vmatpush1.xpose.msra.mxu0 %v1671
    %1682 = vmatprep.subr.mxu0 0.0
    %1683 = vmatpush1.xpose.msra.mxu0 %v1674
    %1684 = vmatprep.subr.mxu0 0.0
    %1685 = vmatpush1.xpose.msra.mxu0 0.0
    %1686 = vmatprep.subr.mxu0 0.0
    %1687 = vmatpush1.xpose.msra.mxu0 0.0
    %1688 = vmatprep.subr.mxu0 0.0
    %1689 = vmatpush1.xpose.msra.mxu0 0.0
    %1690 = vmatprep.subr.mxu0 0.0
    %1691 = vmatpush1.xpose.msra.mxu0 0.0
    %1692 = vmatprep.subr.mxu0 0.0
    %1693 = vmatpush1.xpose.msra.mxu0 0.0
    %1694 = vmatprep.subr.mxu0 0.0
    %1695 = vmatpush1.xpose.msra.mxu0 0.0
    %1696 = vmatprep.subr.mxu0 0.0
    %1697 = vmatpush1.xpose.msra.mxu0 0.0
    %1698 = vmatprep.subr.mxu0 0.0
    %1699 = vmatpush1.xpose.msra.mxu0 0.0
    %1700 = vmatprep.subr.mxu0 0.0
    %1701 = vmatpush1.xpose.msra.mxu0 0.0
    %1702 = vmatprep.subr.mxu0 0.0
    %1703 = vmatpush1.xpose.msra.mxu0 0.0
    %1704 = vmatprep.subr.mxu0 0.0
    %1705 = vmatpush1.xpose.msra.mxu0 0.0
    %1706 = vmatprep.subr.mxu0 0.0
    %1707 = vmatpush1.xpose.msra.mxu0 0.0
    %1708 = vmatprep.subr.mxu0 0.0
    %1709 = vmatpush1.xpose.msra.mxu0 0.0
    %1710 = vmatprep.subr.mxu0 0.0
    %1711 = vmatpush1.xpose.msra.mxu0 0.0
    %1712 = vmatprep.subr.mxu0 0.0
    %1713 = vmatpush1.xpose.msra.mxu0 0.0
    %1714 = vmatprep.subr.mxu0 0.0
    %1715 = vmatpush1.xpose.msra.mxu0 0.0
    %1716 = vmatprep.subr.mxu0 0.0
    %1717 = vmatpush1.xpose.msra.mxu0 0.0
    %1718 = vmatprep.subr.mxu0 0.0
    %1719 = vmatpush1.xpose.msra.mxu0 0.0
    %1720 = vmatprep.subr.mxu0 0.0
    %1721 = vmatpush1.xpose.msra.mxu0 0.0
    %1722 = vmatprep.subr.mxu0 0.0
    %1723 = vmatpush1.xpose.msra.mxu0 0.0
    %1724 = vmatprep.subr.mxu0 0.0
    %1725 = vmatpush1.xpose.msra.mxu0 0.0
    %1726 = vmatprep.subr.mxu0 0.0
    %1727 = vmatpush1.xpose.msra.mxu0 0.0
    %1728 = vmatprep.subr.mxu0 0.0
    %1729 = vmatpush1.xpose.msra.mxu0 0.0
    %1730 = vmatprep.subr.mxu0 0.0
    %1731 = vmatpush1.xpose.msra.mxu0 0.0
    %1732 = vmatprep.subr.mxu0 0.0
    %1733 = vmatpush1.xpose.msra.mxu0 0.0
    %1734 = vmatprep.subr.mxu0 0.0
    %1735 = vmatpush1.xpose.msra.mxu0 0.0
    %1736 = vmatprep.subr.mxu0 0.0
    %1737 = vmatpush1.xpose.msra.mxu0 0.0
    %1738 = vmatprep.subr.mxu0 0.0
    %1739 = vmatpush1.xpose.msra.mxu0 0.0
    %1740 = vmatprep.mubr.f32.mxu0 0.0
    %1741 = vmatmul.mubr.f32.gmra.mrb[0].mxu0 %v1662
    %v1742 = vpop.f32.mrb[0].mxu0
    %v1743 = vadd.f32 0.0, %v1742
    %v1744 = vpop.f32.mrb[0].mxu0
    %1745 = vdwg.mxu0
    %v1746 = vld [vmem:[%s16] sm:$0xff]
    %v1747 = vmul.f32 %v1743, %v1746
    %v1748 = vld [vmem:[%s17] sm:$0xff]
    %v1749 = vld [vmem:[%s17 + $0x8] sm:$0xff]
    %v1750 = vld [vmem:[%s17 + $0x10] sm:$0xff]
    %v1751 = vld [vmem:[%s17 + $0x18] sm:$0xff]
    %v1753 = vsel %vm363, %v1747, 0
    %1755 = vmatprep.subr.mxu0 0.0
    %1756 = vmatpush1.msra.mxu0 %v1748
    %1757 = vmatprep.subr.mxu0 0.0
    %1758 = vmatpush1.msra.mxu0 %v1749
    %1759 = vmatprep.subr.mxu0 0.0
    %1760 = vmatpush1.msra.mxu0 %v1750
    %1761 = vmatprep.subr.mxu0 0.0
    %1762 = vmatpush1.msra.mxu0 %v1751
    %1763 = vmatprep.subr.mxu0 0.0
    %1764 = vmatpush1.msra.mxu0 0.0
    %1765 = vmatprep.subr.mxu0 0.0
    %1766 = vmatpush1.msra.mxu0 0.0
    %1767 = vmatprep.subr.mxu0 0.0
    %1768 = vmatpush1.msra.mxu0 0.0
    %1769 = vmatprep.subr.mxu0 0.0
    %1770 = vmatpush1.msra.mxu0 0.0
    %1771 = vmatprep.subr.mxu0 0.0
    %1772 = vmatpush1.msra.mxu0 0.0
    %1773 = vmatprep.subr.mxu0 0.0
    %1774 = vmatpush1.msra.mxu0 0.0
    %1775 = vmatprep.subr.mxu0 0.0
    %1776 = vmatpush1.msra.mxu0 0.0
    %1777 = vmatprep.subr.mxu0 0.0
    %1778 = vmatpush1.msra.mxu0 0.0
    %1779 = vmatprep.subr.mxu0 0.0
    %1780 = vmatpush1.msra.mxu0 0.0
    %1781 = vmatprep.subr.mxu0 0.0
    %1782 = vmatpush1.msra.mxu0 0.0
    %1783 = vmatprep.subr.mxu0 0.0
    %1784 = vmatpush1.msra.mxu0 0.0
    %1785 = vmatprep.subr.mxu0 0.0
    %1786 = vmatpush1.msra.mxu0 0.0
    %1787 = vmatprep.subr.mxu0 0.0
    %1788 = vmatpush1.msra.mxu0 0.0
    %1789 = vmatprep.subr.mxu0 0.0
    %1790 = vmatpush1.msra.mxu0 0.0
    %1791 = vmatprep.subr.mxu0 0.0
    %1792 = vmatpush1.msra.mxu0 0.0
    %1793 = vmatprep.subr.mxu0 0.0
    %1794 = vmatpush1.msra.mxu0 0.0
    %1795 = vmatprep.subr.mxu0 0.0
    %1796 = vmatpush1.msra.mxu0 0.0
    %1797 = vmatprep.subr.mxu0 0.0
    %1798 = vmatpush1.msra.mxu0 0.0
    %1799 = vmatprep.subr.mxu0 0.0
    %1800 = vmatpush1.msra.mxu0 0.0
    %1801 = vmatprep.subr.mxu0 0.0
    %1802 = vmatpush1.msra.mxu0 0.0
    %1803 = vmatprep.subr.mxu0 0.0
    %1804 = vmatpush1.msra.mxu0 0.0
    %1805 = vmatprep.subr.mxu0 0.0
    %1806 = vmatpush1.msra.mxu0 0.0
    %1807 = vmatprep.subr.mxu0 0.0
    %1808 = vmatpush1.msra.mxu0 0.0
    %1809 = vmatprep.subr.mxu0 0.0
    %1810 = vmatpush1.msra.mxu0 0.0
    %1811 = vmatprep.subr.mxu0 0.0
    %1812 = vmatpush1.msra.mxu0 0.0
    %1813 = vmatprep.subr.mxu0 0.0
    %1814 = vmatpush1.msra.mxu0 0.0
    %1815 = vmatprep.subr.mxu0 0.0
    %1816 = vmatpush1.msra.mxu0 0.0
    %1817 = vmatprep.subr.mxu0 0.0
    %1818 = vmatpush1.msra.mxu0 0.0
    %1819 = vmatprep.mubr.f32.mxu0 0.0
    %1820 = vmatmul.mubr.f32.gmra.mrb[0].mxu0 %v1753
    %v1821 = vpop.f32.mrb[0].mxu0
    %v1822 = vadd.f32 0.0, %v1821
    %v1823 = vpop.f32.mrb[0].mxu0
    %1824 = vdwg.mxu0
    %v1825 = vsub.f32 0.0, %v1822
    %v1826 = vmul.f32 %v1825, 1.442695
    %v1827 = vpow.pop %v1826
    %v1828 = vadd.f32 %v1827, 1.0
    %v1829 = vrcp.pop %v1828
    %1830 = vst.msk [vmem:[%s18] sm:$0xff] %vm92, %v1829
    %v1831 = vld [vmem:[%s1] sm:$0xff]
    %v1832 = vsub.f32 %v1829, %v1831
    %v1833 = vmul.f32 %v1832, %v1832
    %v1834 = vsel %vm92, %v1833, 0.0
    %1835 = vadd.xlane.f32.xlu0 %v1834
    %v1836 = vpop.xlane.xlu0 %1835
    %v1837 = vrot.slane %v1836, 4
    %v1838 = vadd.f32 %v1836, %v1837
    %v1839 = vrot.slane %v1838, 2
    %v1840 = vadd.f32 %v1838, %v1839
    %v1841 = vrot.slane %v1840, 1
    %v1842 = vadd.f32 %v1840, %v1841
    %s1843 = vtos %v1842
    %v1844 = vrcp.pop 2.0
    %s1845 = vtos %v1844
    %s1846 = smul.f32 %s1843, %s1845
    %v1847 = vstv %s1846
    %vm1848 = vcmask 0
    %1849 = vst.msk [vmem:[#allocation2] sm:$0x1] %vm1848, %v1847
    // Predicated region
    $region74: #{tr_forward.1} parent=1 // pred_check
      _
    $region75: #{tr_forward.1} parent=1 // pred_check_branch
      %1851 = sbr.rel (0) target = $region77
    $region76: #{tr_forward.1} parent=1 // pred_region
      _
    $region77: #{tr_forward.1} parent=1 // pred_fallthru
      _
    // Predicated region
    $region78: #{tr_forward.1} parent=1 // pred_check
      _
    $region79: #{tr_forward.1} parent=1 // pred_check_branch
      %1853 = sbr.rel (0) target = $region81
    $region80: #{tr_forward.1} parent=1 // pred_region
      %s1855 = ssub.s32 16, 16
      %1856 = vsyncadd [#allocation3], %s1855
      %s1858 = sshll.u32 [#allocation2], 4
      %s1859 = int_to_ptr.vmem [resolvable:$true] %s1858
      %1861 = dma.vmem_to_hbm [thread:$0]  %s1859, 16, %s19, [#allocation3]
    $region81: #{tr_forward.1} parent=1 // pred_fallthru
      _
    // Predicated region
    $region82: #{tr_forward.1} parent=1 // pred_check
      _
    $region83: #{tr_forward.1} parent=1 // pred_check_branch
      %1863 = sbr.rel (0) target = $region85
    $region84: #{tr_forward.1} parent=1 // pred_region
      _
    $region85: #{tr_forward.1} parent=1 // pred_fallthru
      _
    // Predicated region
    $region86: #{tr_forward.1} parent=1 // pred_check
      _
    $region87: #{tr_forward.1} parent=1 // pred_check_branch
      %1865 = sbr.rel (0) target = $region89
    $region88: #{tr_forward.1} parent=1 // pred_region
      %1866 = dma.done [#allocation3], 16
    $region89: #{tr_forward.1} parent=1 // pred_fallthru
      _
    %1867 = vsyncpa [#allocation3], 1

</llo_original>
